<compile_context>
chip_gen: v6e
topology: v6e:2x2x1
jax: 0.10.0
libtpu: 0.0.40
codegen_flags: <defaults>
</compile_context>

<pallas_src>
import functools
import numpy as np
import jax
import jax.numpy as jnp
from jax.experimental import pallas as pl
from jax.experimental.pallas import tpu as pltpu


def _round_up(x, m):
    return ((x + m - 1) // m) * m


def _fused_forward_kernel(xcol_ref, wp1_ref, wp2_ref, wcrow_ref, out_ref,
                          h1_scr, p1pad_scr, h2_scr,
                          *, B, L, F, K1, K2, MP, CIN):
    L1 = L // MP
    L2 = L1 // MP
    KC1 = K1 * CIN
    KC2 = K2 * F
    pad2 = K2 // 2
    BL1 = B * L1

    # ---- conv1 (im2col built in the wrapper) + folded BN + ReLU ------------
    acc1 = jnp.dot(xcol_ref[...], wp1_ref[0:KC1, :],
                   preferred_element_type=jnp.float32)
    h1_scr[...] = jnp.maximum(acc1 + wp1_ref[KC1:KC1 + 1, :], 0.0)

    # ---- maxpool1: stride-MP reads (sample boundaries align, L % MP == 0) --
    p1 = h1_scr[pl.ds(0, BL1, stride=MP), :]
    for j in range(1, MP):
        p1 = jnp.maximum(p1, h1_scr[pl.ds(j, BL1, stride=MP), :])

    # ---- stage pooled activations with global zero pad for the conv2 taps --
    p1pad_scr[pl.ds(0, pad2), :] = jnp.zeros((pad2, F), jnp.float32)
    p1pad_scr[pl.ds(pad2 + BL1, pad2), :] = jnp.zeros((pad2, F), jnp.float32)
    p1pad_scr[pl.ds(pad2, BL1), :] = p1

    # within-sample position of each row (float trick: no integer div/mod)
    rows = jax.lax.broadcasted_iota(jnp.int32, (BL1, 1), 0).astype(jnp.float32)
    pos = rows - jnp.floor((rows + 0.5) * (1.0 / L1)) * L1

    # ---- conv2 as one im2col matmul + folded BN + ReLU ---------------------
    taps = []
    for t in range(K2):
        tap = p1pad_scr[pl.ds(t, BL1), :]
        off = t - pad2
        if off != 0:
            # zero the rows whose shifted read crossed a sample boundary
            valid = jnp.logical_and(pos + off >= 0.0, pos + off < float(L1))
            tap = tap * valid.astype(jnp.float32)
        taps.append(tap)
    lhs2 = jnp.concatenate(taps, axis=-1)                       # (B*L1, K2*F)
    acc2 = jnp.dot(lhs2, wp2_ref[0:KC2, :],
                   preferred_element_type=jnp.float32)
    h2_scr[...] = jnp.maximum(acc2 + wp2_ref[KC2:KC2 + 1, :], 0.0)

    # ---- maxpool2 fused with the fc feature gather -------------------------
    blocks = []
    for p in range(L2):
        blk = h2_scr[pl.ds(p * MP, B, stride=L1), :]
        for j in range(1, MP):
            blk = jnp.maximum(blk, h2_scr[pl.ds(p * MP + j, B, stride=L1), :])
        blocks.append(blk)                                      # (B, F) each
    feats = jnp.concatenate(blocks, axis=-1)                    # (B, L2*F)

    # ---- fc_convolutional (CNN part): lane-dense (1, B) output -------------
    out = jax.lax.dot_general(wcrow_ref[...], feats,
                              dimension_numbers=(((1,), (1,)), ((), ())),
                              preferred_element_type=jnp.float32)
    out_ref[...] = out.reshape(1, 1, B)


def main_model_forward(x, params, *, maxpoolsize, b_tile=None):
    """Forward of the 'convolution' branch. x: (bs, 4, L) NCL. Returns (bs, 1)."""
    bs, cin, L = x.shape
    w1, b1, g1, be1, m1, v1 = params['conv1']
    w2, b2, g2, be2, m2, v2 = params['conv2']
    cell_emb = params['cell_embedding']
    wfc, bfc = params['fc']
    emb_idx = params['embedding_index']

    F = w1.shape[0]
    K1, K2 = w1.shape[2], w2.shape[2]
    MP = maxpoolsize
    assert L % (MP * MP) == 0
    L1, L2 = L // MP, L // (MP * MP)
    E = cell_emb.shape[1]
    KC1, KC2 = K1 * cin, K2 * F
    pad1, pad2 = K1 // 2, K2 // 2
    eps = 1e-5

    # batch tile: amortize per-step overhead while keeping VMEM use modest
    if b_tile is None:
        b_tile = min(64, _round_up(bs, 8))
    bs_pad = _round_up(bs, b_tile)
    nb = bs_pad // b_tile

    # ---- glue: layout plumbing + parameter folding (plain JAX) -------------
    xT = jnp.transpose(x, (0, 2, 1)).astype(jnp.float32)         # (bs, L, cin)
    xT = jnp.pad(xT, ((0, bs_pad - bs), (pad1, pad1), (0, 0)))   # (bs_pad, L+2p, cin)
    # im2col for conv1: xcol[b, i, t*cin + c] = x_pad[b, i + t, c]
    xcol = jnp.concatenate([xT[:, t:t + L, :] for t in range(K1)], axis=-1)
    xcol = xcol.reshape(bs_pad * L, KC1)

    sc1 = g1 / jnp.sqrt(v1 + eps)
    w1col = (jnp.transpose(w1, (2, 1, 0)) * sc1[None, None, :]).reshape(KC1, F)
    t1 = (sc1 * (b1 - m1) + be1).reshape(1, F)
    wp1 = jnp.concatenate([w1col, t1], axis=0).astype(jnp.float32)   # (KC1+1, F)

    sc2 = g2 / jnp.sqrt(v2 + eps)
    w2col = (jnp.transpose(w2, (2, 1, 0)) * sc2[None, None, :]).reshape(KC2, F)
    t2 = (sc2 * (b2 - m2) + be2).reshape(1, F)
    wp2 = jnp.concatenate([w2col, t2], axis=0).astype(jnp.float32)   # (KC2+1, F)

    # PyTorch flatten order: idx = channel*npos + pos, channels = [F cnn, E emb].
    # CNN part rearranged to (pos-major, channel-minor) to match the kernel's
    # per-sample feature layout; embedding part collapses to one scalar.
    wfc_flat = wfc.reshape(-1)
    wcrow = wfc_flat[:F * L2].reshape(F, L2).T.reshape(1, L2 * F)
    wcrow = wcrow.astype(jnp.float32)
    wes = wfc_flat[F * L2:].reshape(E, L2).sum(axis=1)
    const = jnp.dot(cell_emb[emb_idx].astype(jnp.float32), wes) + bfc

    kernel = functools.partial(_fused_forward_kernel, B=b_tile, L=L, F=F,
                               K1=K1, K2=K2, MP=MP, CIN=cin)

    out = pl.pallas_call(
        kernel,
        out_shape=jax.ShapeDtypeStruct((nb, 1, b_tile), jnp.float32),
        grid_spec=pltpu.PrefetchScalarGridSpec(
            num_scalar_prefetch=0,
            grid=(nb,),
            in_specs=[
                pl.BlockSpec((b_tile * L, KC1), lambda b: (b, 0)),
                pl.BlockSpec((KC1 + 1, F), lambda b: (0, 0)),
                pl.BlockSpec((KC2 + 1, F), lambda b: (0, 0)),
                pl.BlockSpec((1, L2 * F), lambda b: (0, 0)),
            ],
            out_specs=pl.BlockSpec((1, 1, b_tile), lambda b: (b, 0, 0)),
            scratch_shapes=[
                pltpu.VMEM((b_tile * L, F), jnp.float32),
                pltpu.VMEM((b_tile * L1 + 2 * pad2, F), jnp.float32),
                pltpu.VMEM((b_tile * L1, F), jnp.float32),
            ],
        ),
        compiler_params=pltpu.CompilerParams(
            dimension_semantics=("parallel",),
            vmem_limit_bytes=32 * 1024 * 1024),
    )(xcol, wp1, wp2, wcrow)

    out = out.reshape(bs_pad)[:bs].reshape(bs, 1) + const
    return out


def _reference_forward(x, params, *, maxpoolsize):
    """Pure-JAX reference mirroring the PyTorch forward (eval mode, f32 HIGHEST)."""
    w1, b1, g1, be1, m1, v1 = params['conv1']
    w2, b2, g2, be2, m2, v2 = params['conv2']
    cell_emb = params['cell_embedding']
    wfc, bfc = params['fc']
    emb_idx = params['embedding_index']
    eps = 1e-5
    MP = maxpoolsize

    def conv_bn_relu_pool(h, w, b, g, be, m, v):
        pad = w.shape[2] // 2
        z = jax.lax.conv_general_dilated(
            h, w, window_strides=(1,), padding=[(pad, pad)],
            dimension_numbers=('NCH', 'OIH', 'NCH'),
            precision=jax.lax.Precision.HIGHEST)
        z = z + b[None, :, None]
        z = (z - m[None, :, None]) / jnp.sqrt(v[None, :, None] + eps) \
            * g[None, :, None] + be[None, :, None]
        z = jnp.maximum(z, 0.0)
        bs, F, L = z.shape
        return z.reshape(bs, F, L // MP, MP).max(axis=-1)

    h = conv_bn_relu_pool(x, w1, b1, g1, be1, m1, v1)
    h = conv_bn_relu_pool(h, w2, b2, g2, be2, m2, v2)
    bs, F, npos = h.shape
    emb = cell_emb[emb_idx].reshape(1, -1, 1)
    emb = jnp.broadcast_to(emb, (bs, emb.shape[1], npos))
    feat = jnp.concatenate([h, emb], axis=1).reshape(bs, -1)
    return feat @ wfc.reshape(-1, 1) + bfc


if __name__ == "__main__":
    # 'convolution' branch implies num_filter + cell_embedding_dim(16) ==
    # 2*num_filter  =>  num_filter = 16.
    num_filter = 16
    seqlen = 64
    maxpoolsize = 4
    num_DNase_classes = 8
    cin = 4          # one-hot DNA channels
    k1 = k2 = 5
    E = 16
    bs = 2
    npos = seqlen // (maxpoolsize * maxpoolsize)

    key = jax.random.PRNGKey(0)
    ks = jax.random.split(key, 16)
    x = jax.random.normal(ks[0], (bs, cin, seqlen), jnp.float32)

    params = {
        'conv1': (
            0.2 * jax.random.normal(ks[1], (num_filter, cin, k1), jnp.float32),
            0.1 * jax.random.normal(ks[2], (num_filter,), jnp.float32),
            1.0 + 0.1 * jax.random.normal(ks[3], (num_filter,), jnp.float32),
            0.1 * jax.random.normal(ks[4], (num_filter,), jnp.float32),
            0.05 * jax.random.normal(ks[5], (num_filter,), jnp.float32),
            0.5 + jnp.abs(jax.random.normal(ks[6], (num_filter,), jnp.float32)),
        ),
        'conv2': (
            0.2 * jax.random.normal(ks[7], (num_filter, num_filter, k2), jnp.float32),
            0.1 * jax.random.normal(ks[8], (num_filter,), jnp.float32),
            1.0 + 0.1 * jax.random.normal(ks[9], (num_filter,), jnp.float32),
            0.1 * jax.random.normal(ks[10], (num_filter,), jnp.float32),
            0.05 * jax.random.normal(ks[11], (num_filter,), jnp.float32),
            0.5 + jnp.abs(jax.random.normal(ks[12], (num_filter,), jnp.float32)),
        ),
        'cell_embedding': 0.5 * jax.random.normal(
            ks[13], (num_DNase_classes, E), jnp.float32),
        'fc': (
            0.1 * jax.random.normal(ks[14], (1, num_filter * 2 * npos), jnp.float32),
            0.05 * jax.random.normal(ks[15], (), jnp.float32),
        ),
        'embedding_index': 3,
    }

    out = jax.block_until_ready(main_model_forward(x, params, maxpoolsize=maxpoolsize))
    ref = jax.block_until_ready(_reference_forward(x, params, maxpoolsize=maxpoolsize))

    assert out.shape == (bs, 1)
    # Kernel matmuls run at default MXU precision (per perf feedback, no
    # Precision.HIGHEST); the reference runs full-f32 HIGHEST, so allow
    # bf16-pass-level tolerance.
    np.testing.assert_allclose(np.asarray(out), np.asarray(ref),
                               rtol=2e-2, atol=2e-2)
    print("KERNEL_OK")
</pallas_src>

<mosaic_0001>
module attributes {stable_mosaic.version = 11 : i64} {
  func.func @_fused_forward_kernel(%arg0: i32, %arg1: memref<512x20xf32, #tpu.memory_space<vmem>>, %arg2: memref<21x16xf32, #tpu.memory_space<vmem>>, %arg3: memref<81x16xf32, #tpu.memory_space<vmem>>, %arg4: memref<1x64xf32, #tpu.memory_space<vmem>>, %arg5: memref<1x1x8xf32, #tpu.memory_space<vmem>>, %arg6: memref<512x16xf32, #tpu.memory_space<vmem>>, %arg7: memref<132x16xf32, #tpu.memory_space<vmem>>, %arg8: memref<128x16xf32, #tpu.memory_space<vmem>>) attributes {dimension_semantics = [#tpu.dimension_semantics<parallel>], iteration_bounds = array<i64: 1>, scalar_prefetch = 0 : i64, scratch_operands = 3 : i64, tpu.core_type = #tpu.core_type<tc>, window_params = [{transform_indices = @transform_0, window_bounds = array<i64: 512, 20>}, {pipeline_mode = #tpu.pipeline_mode<synchronous>, transform_indices = @transform_1, window_bounds = array<i64: 21, 16>}, {pipeline_mode = #tpu.pipeline_mode<synchronous>, transform_indices = @transform_2, window_bounds = array<i64: 81, 16>}, {pipeline_mode = #tpu.pipeline_mode<synchronous>, transform_indices = @transform_3, window_bounds = array<i64: 1, 64>}, {transform_indices = @transform_4, window_bounds = array<i64: 1, 1, 8>}]} {
    %c0 = arith.constant 0 : index
    %c0_0 = arith.constant 0 : index
    %0 = vector.load %arg1[%c0, %c0_0] : memref<512x20xf32, #tpu.memory_space<vmem>>, vector<512x20xf32>
    %c0_1 = arith.constant 0 : index
    %c0_2 = arith.constant 0 : index
    %1 = vector.load %arg2[%c0_1, %c0_2] : memref<21x16xf32, #tpu.memory_space<vmem>>, vector<20x16xf32>
    %cst = arith.constant dense<0.000000e+00> : vector<512x16xf32>
    %2 = tpu.matmul %0, %1, %cst {dimension_numbers = #tpu.dot_dimension_numbers<[1], [0], [0], [1], [0, 0, 1, 1], [], []>} : vector<512x20xf32>, vector<20x16xf32>, vector<512x16xf32> -> vector<512x16xf32>
    %c20 = arith.constant 20 : index
    %c0_3 = arith.constant 0 : index
    %3 = vector.load %arg2[%c20, %c0_3] : memref<21x16xf32, #tpu.memory_space<vmem>>, vector<1x16xf32>
    %4 = vector.broadcast %3 : vector<1x16xf32> to vector<512x16xf32>
    %5 = arith.addf %2, %4 : vector<512x16xf32>
    %cst_4 = arith.constant 0.000000e+00 : f32
    %6 = vector.broadcast %cst_4 : f32 to vector<512x16xf32>
    %7 = arith.maximumf %5, %6 : vector<512x16xf32>
    %c0_5 = arith.constant 0 : index
    %c0_6 = arith.constant 0 : index
    %8 = vector.load %arg6[%c0_5, %c0_6] : memref<512x16xf32, #tpu.memory_space<vmem>>, vector<512x16xf32>
    tpu.vector_store %arg6[%c0_5, %c0_6], %7 {strides = array<i32>} : memref<512x16xf32, #tpu.memory_space<vmem>>, vector<512x16xf32>,
    %c0_7 = arith.constant 0 : index
    %c0_8 = arith.constant 0 : index
    %9 = tpu.strided_load %arg6[%c0_7, %c0_8] {strides = array<i32: 4, 1>} : memref<512x16xf32, #tpu.memory_space<vmem>>, vector<128x16xf32>
    %c1 = arith.constant 1 : index
    %c0_9 = arith.constant 0 : index
    %10 = tpu.strided_load %arg6[%c1, %c0_9] {strides = array<i32: 4, 1>} : memref<512x16xf32, #tpu.memory_space<vmem>>, vector<128x16xf32>
    %11 = arith.maximumf %9, %10 : vector<128x16xf32>
    %c2 = arith.constant 2 : index
    %c0_10 = arith.constant 0 : index
    %12 = tpu.strided_load %arg6[%c2, %c0_10] {strides = array<i32: 4, 1>} : memref<512x16xf32, #tpu.memory_space<vmem>>, vector<128x16xf32>
    %13 = arith.maximumf %11, %12 : vector<128x16xf32>
    %c3 = arith.constant 3 : index
    %c0_11 = arith.constant 0 : index
    %14 = tpu.strided_load %arg6[%c3, %c0_11] {strides = array<i32: 4, 1>} : memref<512x16xf32, #tpu.memory_space<vmem>>, vector<128x16xf32>
    %15 = arith.maximumf %13, %14 : vector<128x16xf32>
    %cst_12 = arith.constant 0.000000e+00 : f32
    %16 = vector.broadcast %cst_12 : f32 to vector<2x16xf32>
    %c0_13 = arith.constant 0 : index
    %c0_14 = arith.constant 0 : index
    %17 = vector.load %arg7[%c0_13, %c0_14] : memref<132x16xf32, #tpu.memory_space<vmem>>, vector<2x16xf32>
    tpu.vector_store %arg7[%c0_13, %c0_14], %16 {strides = array<i32>} : memref<132x16xf32, #tpu.memory_space<vmem>>, vector<2x16xf32>,
    %cst_15 = arith.constant 0.000000e+00 : f32
    %18 = vector.broadcast %cst_15 : f32 to vector<2x16xf32>
    %c130 = arith.constant 130 : index
    %c0_16 = arith.constant 0 : index
    %19 = vector.load %arg7[%c130, %c0_16] : memref<132x16xf32, #tpu.memory_space<vmem>>, vector<2x16xf32>
    tpu.vector_store %arg7[%c130, %c0_16], %18 {strides = array<i32>} : memref<132x16xf32, #tpu.memory_space<vmem>>, vector<2x16xf32>,
    %c2_17 = arith.constant 2 : index
    %c0_18 = arith.constant 0 : index
    %20 = vector.load %arg7[%c2_17, %c0_18] : memref<132x16xf32, #tpu.memory_space<vmem>>, vector<128x16xf32>
    tpu.vector_store %arg7[%c2_17, %c0_18], %15 {strides = array<i32>} : memref<132x16xf32, #tpu.memory_space<vmem>>, vector<128x16xf32>,
    %21 = tpu.iota {dimensions = array<i32: 0>} : vector<128x1xi32>
    %22 = arith.sitofp %21 : vector<128x1xi32> to vector<128x1xf32>
    %cst_19 = arith.constant 5.000000e-01 : f32
    %23 = vector.broadcast %cst_19 : f32 to vector<128x1xf32>
    %24 = arith.addf %22, %23 : vector<128x1xf32>
    %cst_20 = arith.constant 6.250000e-02 : f32
    %25 = vector.broadcast %cst_20 : f32 to vector<128x1xf32>
    %26 = arith.mulf %24, %25 : vector<128x1xf32>
    %27 = math.floor %26 : vector<128x1xf32>
    %cst_21 = arith.constant 1.600000e+01 : f32
    %28 = vector.broadcast %cst_21 : f32 to vector<128x1xf32>
    %29 = arith.mulf %27, %28 : vector<128x1xf32>
    %30 = arith.subf %22, %29 : vector<128x1xf32>
    %c0_22 = arith.constant 0 : index
    %c0_23 = arith.constant 0 : index
    %31 = vector.load %arg7[%c0_22, %c0_23] : memref<132x16xf32, #tpu.memory_space<vmem>>, vector<128x16xf32>
    %cst_24 = arith.constant -2.000000e+00 : f32
    %32 = vector.broadcast %cst_24 : f32 to vector<128x1xf32>
    %33 = arith.addf %30, %32 : vector<128x1xf32>
    %cst_25 = arith.constant 0.000000e+00 : f32
    %34 = vector.broadcast %cst_25 : f32 to vector<128x1xf32>
    %35 = arith.cmpf oge, %33, %34 : vector<128x1xf32>
    %cst_26 = arith.constant -2.000000e+00 : f32
    %36 = vector.broadcast %cst_26 : f32 to vector<128x1xf32>
    %37 = arith.addf %30, %36 : vector<128x1xf32>
    %cst_27 = arith.constant 1.600000e+01 : f32
    %38 = vector.broadcast %cst_27 : f32 to vector<128x1xf32>
    %39 = arith.cmpf olt, %37, %38 : vector<128x1xf32>
    %40 = arith.andi %35, %39 : vector<128x1xi1>
    %41 = arith.extui %40 : vector<128x1xi1> to vector<128x1xi32>
    %42 = arith.sitofp %41 : vector<128x1xi32> to vector<128x1xf32>
    %43 = vector.broadcast %42 : vector<128x1xf32> to vector<128x16xf32>
    %44 = arith.mulf %31, %43 : vector<128x16xf32>
    %c1_28 = arith.constant 1 : index
    %c0_29 = arith.constant 0 : index
    %45 = vector.load %arg7[%c1_28, %c0_29] : memref<132x16xf32, #tpu.memory_space<vmem>>, vector<128x16xf32>
    %cst_30 = arith.constant -1.000000e+00 : f32
    %46 = vector.broadcast %cst_30 : f32 to vector<128x1xf32>
    %47 = arith.addf %30, %46 : vector<128x1xf32>
    %cst_31 = arith.constant 0.000000e+00 : f32
    %48 = vector.broadcast %cst_31 : f32 to vector<128x1xf32>
    %49 = arith.cmpf oge, %47, %48 : vector<128x1xf32>
    %cst_32 = arith.constant -1.000000e+00 : f32
    %50 = vector.broadcast %cst_32 : f32 to vector<128x1xf32>
    %51 = arith.addf %30, %50 : vector<128x1xf32>
    %cst_33 = arith.constant 1.600000e+01 : f32
    %52 = vector.broadcast %cst_33 : f32 to vector<128x1xf32>
    %53 = arith.cmpf olt, %51, %52 : vector<128x1xf32>
    %54 = arith.andi %49, %53 : vector<128x1xi1>
    %55 = arith.extui %54 : vector<128x1xi1> to vector<128x1xi32>
    %56 = arith.sitofp %55 : vector<128x1xi32> to vector<128x1xf32>
    %57 = vector.broadcast %56 : vector<128x1xf32> to vector<128x16xf32>
    %58 = arith.mulf %45, %57 : vector<128x16xf32>
    %c2_34 = arith.constant 2 : index
    %c0_35 = arith.constant 0 : index
    %59 = vector.load %arg7[%c2_34, %c0_35] : memref<132x16xf32, #tpu.memory_space<vmem>>, vector<128x16xf32>
    %c3_36 = arith.constant 3 : index
    %c0_37 = arith.constant 0 : index
    %60 = vector.load %arg7[%c3_36, %c0_37] : memref<132x16xf32, #tpu.memory_space<vmem>>, vector<128x16xf32>
    %cst_38 = arith.constant 1.000000e+00 : f32
    %61 = vector.broadcast %cst_38 : f32 to vector<128x1xf32>
    %62 = arith.addf %30, %61 : vector<128x1xf32>
    %cst_39 = arith.constant 0.000000e+00 : f32
    %63 = vector.broadcast %cst_39 : f32 to vector<128x1xf32>
    %64 = arith.cmpf oge, %62, %63 : vector<128x1xf32>
    %cst_40 = arith.constant 1.000000e+00 : f32
    %65 = vector.broadcast %cst_40 : f32 to vector<128x1xf32>
    %66 = arith.addf %30, %65 : vector<128x1xf32>
    %cst_41 = arith.constant 1.600000e+01 : f32
    %67 = vector.broadcast %cst_41 : f32 to vector<128x1xf32>
    %68 = arith.cmpf olt, %66, %67 : vector<128x1xf32>
    %69 = arith.andi %64, %68 : vector<128x1xi1>
    %70 = arith.extui %69 : vector<128x1xi1> to vector<128x1xi32>
    %71 = arith.sitofp %70 : vector<128x1xi32> to vector<128x1xf32>
    %72 = vector.broadcast %71 : vector<128x1xf32> to vector<128x16xf32>
    %73 = arith.mulf %60, %72 : vector<128x16xf32>
    %c4 = arith.constant 4 : index
    %c0_42 = arith.constant 0 : index
    %74 = vector.load %arg7[%c4, %c0_42] : memref<132x16xf32, #tpu.memory_space<vmem>>, vector<128x16xf32>
    %cst_43 = arith.constant 2.000000e+00 : f32
    %75 = vector.broadcast %cst_43 : f32 to vector<128x1xf32>
    %76 = arith.addf %30, %75 : vector<128x1xf32>
    %cst_44 = arith.constant 0.000000e+00 : f32
    %77 = vector.broadcast %cst_44 : f32 to vector<128x1xf32>
    %78 = arith.cmpf oge, %76, %77 : vector<128x1xf32>
    %cst_45 = arith.constant 2.000000e+00 : f32
    %79 = vector.broadcast %cst_45 : f32 to vector<128x1xf32>
    %80 = arith.addf %30, %79 : vector<128x1xf32>
    %cst_46 = arith.constant 1.600000e+01 : f32
    %81 = vector.broadcast %cst_46 : f32 to vector<128x1xf32>
    %82 = arith.cmpf olt, %80, %81 : vector<128x1xf32>
    %83 = arith.andi %78, %82 : vector<128x1xi1>
    %84 = arith.extui %83 : vector<128x1xi1> to vector<128x1xi32>
    %85 = arith.sitofp %84 : vector<128x1xi32> to vector<128x1xf32>
    %86 = vector.broadcast %85 : vector<128x1xf32> to vector<128x16xf32>
    %87 = arith.mulf %74, %86 : vector<128x16xf32>
    %88 = tpu.concatenate %44, %58, %59, %73, %87 in 1 : vector<128x16xf32>, vector<128x16xf32>, vector<128x16xf32>, vector<128x16xf32>, vector<128x16xf32> -> vector<128x80xf32>
    %c0_47 = arith.constant 0 : index
    %c0_48 = arith.constant 0 : index
    %89 = vector.load %arg3[%c0_47, %c0_48] : memref<81x16xf32, #tpu.memory_space<vmem>>, vector<80x16xf32>
    %cst_49 = arith.constant dense<0.000000e+00> : vector<128x16xf32>
    %90 = tpu.matmul %88, %89, %cst_49 {dimension_numbers = #tpu.dot_dimension_numbers<[1], [0], [0], [1], [0, 0, 1, 1], [], []>} : vector<128x80xf32>, vector<80x16xf32>, vector<128x16xf32> -> vector<128x16xf32>
    %c80 = arith.constant 80 : index
    %c0_50 = arith.constant 0 : index
    %91 = vector.load %arg3[%c80, %c0_50] : memref<81x16xf32, #tpu.memory_space<vmem>>, vector<1x16xf32>
    %92 = vector.broadcast %91 : vector<1x16xf32> to vector<128x16xf32>
    %93 = arith.addf %90, %92 : vector<128x16xf32>
    %cst_51 = arith.constant 0.000000e+00 : f32
    %94 = vector.broadcast %cst_51 : f32 to vector<128x16xf32>
    %95 = arith.maximumf %93, %94 : vector<128x16xf32>
    %c0_52 = arith.constant 0 : index
    %c0_53 = arith.constant 0 : index
    %96 = vector.load %arg8[%c0_52, %c0_53] : memref<128x16xf32, #tpu.memory_space<vmem>>, vector<128x16xf32>
    tpu.vector_store %arg8[%c0_52, %c0_53], %95 {strides = array<i32>} : memref<128x16xf32, #tpu.memory_space<vmem>>, vector<128x16xf32>,
    %c0_54 = arith.constant 0 : index
    %c0_55 = arith.constant 0 : index
    %97 = tpu.strided_load %arg8[%c0_54, %c0_55] {strides = array<i32: 16, 1>} : memref<128x16xf32, #tpu.memory_space<vmem>>, vector<8x16xf32>
    %c1_56 = arith.constant 1 : index
    %c0_57 = arith.constant 0 : index
    %98 = tpu.strided_load %arg8[%c1_56, %c0_57] {strides = array<i32: 16, 1>} : memref<128x16xf32, #tpu.memory_space<vmem>>, vector<8x16xf32>
    %99 = arith.maximumf %97, %98 : vector<8x16xf32>
    %c2_58 = arith.constant 2 : index
    %c0_59 = arith.constant 0 : index
    %100 = tpu.strided_load %arg8[%c2_58, %c0_59] {strides = array<i32: 16, 1>} : memref<128x16xf32, #tpu.memory_space<vmem>>, vector<8x16xf32>
    %101 = arith.maximumf %99, %100 : vector<8x16xf32>
    %c3_60 = arith.constant 3 : index
    %c0_61 = arith.constant 0 : index
    %102 = tpu.strided_load %arg8[%c3_60, %c0_61] {strides = array<i32: 16, 1>} : memref<128x16xf32, #tpu.memory_space<vmem>>, vector<8x16xf32>
    %103 = arith.maximumf %101, %102 : vector<8x16xf32>
    %c4_62 = arith.constant 4 : index
    %c0_63 = arith.constant 0 : index
    %104 = tpu.strided_load %arg8[%c4_62, %c0_63] {strides = array<i32: 16, 1>} : memref<128x16xf32, #tpu.memory_space<vmem>>, vector<8x16xf32>
    %c5 = arith.constant 5 : index
    %c0_64 = arith.constant 0 : index
    %105 = tpu.strided_load %arg8[%c5, %c0_64] {strides = array<i32: 16, 1>} : memref<128x16xf32, #tpu.memory_space<vmem>>, vector<8x16xf32>
    %106 = arith.maximumf %104, %105 : vector<8x16xf32>
    %c6 = arith.constant 6 : index
    %c0_65 = arith.constant 0 : index
    %107 = tpu.strided_load %arg8[%c6, %c0_65] {strides = array<i32: 16, 1>} : memref<128x16xf32, #tpu.memory_space<vmem>>, vector<8x16xf32>
    %108 = arith.maximumf %106, %107 : vector<8x16xf32>
    %c7 = arith.constant 7 : index
    %c0_66 = arith.constant 0 : index
    %109 = tpu.strided_load %arg8[%c7, %c0_66] {strides = array<i32: 16, 1>} : memref<128x16xf32, #tpu.memory_space<vmem>>, vector<8x16xf32>
    %110 = arith.maximumf %108, %109 : vector<8x16xf32>
    %c8 = arith.constant 8 : index
    %c0_67 = arith.constant 0 : index
    %111 = tpu.strided_load %arg8[%c8, %c0_67] {strides = array<i32: 16, 1>} : memref<128x16xf32, #tpu.memory_space<vmem>>, vector<8x16xf32>
    %c9 = arith.constant 9 : index
    %c0_68 = arith.constant 0 : index
    %112 = tpu.strided_load %arg8[%c9, %c0_68] {strides = array<i32: 16, 1>} : memref<128x16xf32, #tpu.memory_space<vmem>>, vector<8x16xf32>
    %113 = arith.maximumf %111, %112 : vector<8x16xf32>
    %c10 = arith.constant 10 : index
    %c0_69 = arith.constant 0 : index
    %114 = tpu.strided_load %arg8[%c10, %c0_69] {strides = array<i32: 16, 1>} : memref<128x16xf32, #tpu.memory_space<vmem>>, vector<8x16xf32>
    %115 = arith.maximumf %113, %114 : vector<8x16xf32>
    %c11 = arith.constant 11 : index
    %c0_70 = arith.constant 0 : index
    %116 = tpu.strided_load %arg8[%c11, %c0_70] {strides = array<i32: 16, 1>} : memref<128x16xf32, #tpu.memory_space<vmem>>, vector<8x16xf32>
    %117 = arith.maximumf %115, %116 : vector<8x16xf32>
    %c12 = arith.constant 12 : index
    %c0_71 = arith.constant 0 : index
    %118 = tpu.strided_load %arg8[%c12, %c0_71] {strides = array<i32: 16, 1>} : memref<128x16xf32, #tpu.memory_space<vmem>>, vector<8x16xf32>
    %c13 = arith.constant 13 : index
    %c0_72 = arith.constant 0 : index
    %119 = tpu.strided_load %arg8[%c13, %c0_72] {strides = array<i32: 16, 1>} : memref<128x16xf32, #tpu.memory_space<vmem>>, vector<8x16xf32>
    %120 = arith.maximumf %118, %119 : vector<8x16xf32>
    %c14 = arith.constant 14 : index
    %c0_73 = arith.constant 0 : index
    %121 = tpu.strided_load %arg8[%c14, %c0_73] {strides = array<i32: 16, 1>} : memref<128x16xf32, #tpu.memory_space<vmem>>, vector<8x16xf32>
    %122 = arith.maximumf %120, %121 : vector<8x16xf32>
    %c15 = arith.constant 15 : index
    %c0_74 = arith.constant 0 : index
    %123 = tpu.strided_load %arg8[%c15, %c0_74] {strides = array<i32: 16, 1>} : memref<128x16xf32, #tpu.memory_space<vmem>>, vector<8x16xf32>
    %124 = arith.maximumf %122, %123 : vector<8x16xf32>
    %125 = tpu.concatenate %103, %110, %117, %124 in 1 : vector<8x16xf32>, vector<8x16xf32>, vector<8x16xf32>, vector<8x16xf32> -> vector<8x64xf32>
    %c0_75 = arith.constant 0 : index
    %c0_76 = arith.constant 0 : index
    %126 = vector.load %arg4[%c0_75, %c0_76] : memref<1x64xf32, #tpu.memory_space<vmem>>, vector<1x64xf32>
    %cst_77 = arith.constant dense<0.000000e+00> : vector<1x8xf32>
    %127 = tpu.matmul %126, %125, %cst_77 {dimension_numbers = #tpu.dot_dimension_numbers<[1], [1], [0], [0], [0, 0, 1, 0], [], []>} : vector<1x64xf32>, vector<8x64xf32>, vector<1x8xf32> -> vector<1x8xf32>
    %128 = vector.shape_cast %127 : vector<1x8xf32> to vector<1x1x8xf32>
    %c0_78 = arith.constant 0 : index
    %c0_79 = arith.constant 0 : index
    %c0_80 = arith.constant 0 : index
    %129 = vector.load %arg5[%c0_78, %c0_79, %c0_80] : memref<1x1x8xf32, #tpu.memory_space<vmem>>, vector<1x1x8xf32>
    tpu.vector_store %arg5[%c0_78, %c0_79, %c0_80], %128 {strides = array<i32>} : memref<1x1x8xf32, #tpu.memory_space<vmem>>, vector<1x1x8xf32>,
    return
  }
  func.func @transform_0(%arg0: i32) -> (i32, i32) {
    %c0_i32 = arith.constant 0 : i32
    %c0_i32_0 = arith.constant 0 : i32
    return %arg0, %c0_i32 : i32, i32
  }
  func.func @transform_1(%arg0: i32) -> (i32, i32) {
    %c0_i32 = arith.constant 0 : i32
    %c0_i32_0 = arith.constant 0 : i32
    %c0_i32_1 = arith.constant 0 : i32
    return %c0_i32, %c0_i32_0 : i32, i32
  }
  func.func @transform_2(%arg0: i32) -> (i32, i32) {
    %c0_i32 = arith.constant 0 : i32
    %c0_i32_0 = arith.constant 0 : i32
    %c0_i32_1 = arith.constant 0 : i32
    return %c0_i32, %c0_i32_0 : i32, i32
  }
  func.func @transform_3(%arg0: i32) -> (i32, i32) {
    %c0_i32 = arith.constant 0 : i32
    %c0_i32_0 = arith.constant 0 : i32
    %c0_i32_1 = arith.constant 0 : i32
    return %c0_i32, %c0_i32_0 : i32, i32
  }
  func.func @transform_4(%arg0: i32) -> (i32, i32, i32) {
    %c0_i32 = arith.constant 0 : i32
    %c0_i32_0 = arith.constant 0 : i32
    %c0_i32_1 = arith.constant 0 : i32
    return %arg0, %c0_i32, %c0_i32_0 : i32, i32, i32
  }
}

</mosaic_0001>

<llo_original>
// kernel: tpu_custom_call.1
$region0: #{tpu_custom_call.1}
  #allocation0 [shape = 'u32[]', space=smem, size = 0x4, offset = 0x4, fixed_abs, tag = 'smem constant byte address 0x4 - core index']
  #allocation1 [shape = 'u32[144,128]{1,0:T(1,128)}', space=vmem, size = 0x12000, scoped, tag = 'internal scratch']
  #allocation2 [shape = 'f32[512,16]{1,0:T(8,128)}', space=vmem, size = 0x40000, scoped, tag = 'scratch operand']
  #allocation3 [shape = 'f32[132,16]{1,0:T(8,128)}', space=vmem, size = 0x11000, scoped, tag = 'scratch operand']
  #allocation4 [shape = 'f32[128,16]{1,0:T(8,128)}', space=vmem, size = 0x10000, scoped, tag = 'scratch operand']
  %s0 = inlined_call_operand.vmem [shape: f32[512,20], index: 0, kind: input, shape index: {}]
  %s1 = inlined_call_operand.vmem [shape: f32[21,16], index: 1, kind: input, shape index: {}]
  %s2 = inlined_call_operand.vmem [shape: f32[81,16], index: 2, kind: input, shape index: {}]
  %s3 = inlined_call_operand.vmem [shape: f32[1,64], index: 3, kind: input, shape index: {}]
  %s4 = inlined_call_operand.hbm [shape: f32[1,1,8], index: 4, kind: output, shape index: {}]
  %s5 = sld [smem:[#allocation0]]
  $region26: #{tpu_custom_call.1} parent=0
    _
  %s7 = ssub.s32 1, %s5
  %s8 = scalar_select 0, %s7, %s5
  $region1: #{tpu_custom_call.1} parent=0
    #allocation5 [shape = 'u8[512]{0}', space=vmem, size = 0x400, scoped, tag = 'output window, operand 0, single buffered']
    #allocation6 [shape = 's32[1]{0}', space=sflag, size = 0x4, scoped, tag = 'scoped memory for tpu_custom_call.1']
    %9 = vsyncpa [#allocation6], 0
    // Predicated region
    $region2: #{tpu_custom_call.1} parent=1 // pred_check
      _
    $region3: #{tpu_custom_call.1} parent=1 // pred_check_branch
      %11 = sbr.rel (0) target = $region5
    $region4: #{tpu_custom_call.1} parent=1 // pred_region
      _
    $region5: #{tpu_custom_call.1} parent=1 // pred_fallthru
      _
    // Predicated region
    $region6: #{tpu_custom_call.1} parent=1 // pred_check
      _
    $region7: #{tpu_custom_call.1} parent=1 // pred_check_branch
      %13 = sbr.rel (0) target = $region9
    $region8: #{tpu_custom_call.1} parent=1 // pred_region
      _
    $region9: #{tpu_custom_call.1} parent=1 // pred_fallthru
      _
    // Predicated region
    $region10: #{tpu_custom_call.1} parent=1 // pred_check
      _
    $region11: #{tpu_custom_call.1} parent=1 // pred_check_branch
      %15 = sbr.rel (0) target = $region13
    $region12: #{tpu_custom_call.1} parent=1 // pred_region
      _
    $region13: #{tpu_custom_call.1} parent=1 // pred_fallthru
      _
    // Predicated region
    $region14: #{tpu_custom_call.1} parent=1 // pred_check
      _
    $region15: #{tpu_custom_call.1} parent=1 // pred_check_branch
      %17 = sbr.rel (0) target = $region17
    $region16: #{tpu_custom_call.1} parent=1 // pred_region
      _
    $region17: #{tpu_custom_call.1} parent=1 // pred_fallthru
      _
    %v18 = vld [vmem:[%s0] sm:$0xff]
    %v19 = vld [vmem:[%s0 + $0x8] sm:$0xff]
    %v20 = vld [vmem:[%s0 + $0x10] sm:$0xff]
    %v21 = vld [vmem:[%s0 + $0x18] sm:$0xff]
    %v22 = vld [vmem:[%s0 + $0x20] sm:$0xff]
    %v23 = vld [vmem:[%s0 + $0x28] sm:$0xff]
    %v24 = vld [vmem:[%s0 + $0x30] sm:$0xff]
    %v25 = vld [vmem:[%s0 + $0x38] sm:$0xff]
    %v26 = vld [vmem:[%s0 + $0x40] sm:$0xff]
    %v27 = vld [vmem:[%s0 + $0x48] sm:$0xff]
    %v28 = vld [vmem:[%s0 + $0x50] sm:$0xff]
    %v29 = vld [vmem:[%s0 + $0x58] sm:$0xff]
    %v30 = vld [vmem:[%s0 + $0x60] sm:$0xff]
    %v31 = vld [vmem:[%s0 + $0x68] sm:$0xff]
    %v32 = vld [vmem:[%s0 + $0x70] sm:$0xff]
    %v33 = vld [vmem:[%s0 + $0x78] sm:$0xff]
    %v34 = vld [vmem:[%s0 + $0x80] sm:$0xff]
    %v35 = vld [vmem:[%s0 + $0x88] sm:$0xff]
    %v36 = vld [vmem:[%s0 + $0x90] sm:$0xff]
    %v37 = vld [vmem:[%s0 + $0x98] sm:$0xff]
    %v38 = vld [vmem:[%s0 + $0xa0] sm:$0xff]
    %v39 = vld [vmem:[%s0 + $0xa8] sm:$0xff]
    %v40 = vld [vmem:[%s0 + $0xb0] sm:$0xff]
    %v41 = vld [vmem:[%s0 + $0xb8] sm:$0xff]
    %v42 = vld [vmem:[%s0 + $0xc0] sm:$0xff]
    %v43 = vld [vmem:[%s0 + $0xc8] sm:$0xff]
    %v44 = vld [vmem:[%s0 + $0xd0] sm:$0xff]
    %v45 = vld [vmem:[%s0 + $0xd8] sm:$0xff]
    %v46 = vld [vmem:[%s0 + $0xe0] sm:$0xff]
    %v47 = vld [vmem:[%s0 + $0xe8] sm:$0xff]
    %v48 = vld [vmem:[%s0 + $0xf0] sm:$0xff]
    %v49 = vld [vmem:[%s0 + $0xf8] sm:$0xff]
    %v50 = vld [vmem:[%s0 + $0x100] sm:$0xff]
    %v51 = vld [vmem:[%s0 + $0x108] sm:$0xff]
    %v52 = vld [vmem:[%s0 + $0x110] sm:$0xff]
    %v53 = vld [vmem:[%s0 + $0x118] sm:$0xff]
    %v54 = vld [vmem:[%s0 + $0x120] sm:$0xff]
    %v55 = vld [vmem:[%s0 + $0x128] sm:$0xff]
    %v56 = vld [vmem:[%s0 + $0x130] sm:$0xff]
    %v57 = vld [vmem:[%s0 + $0x138] sm:$0xff]
    %v58 = vld [vmem:[%s0 + $0x140] sm:$0xff]
    %v59 = vld [vmem:[%s0 + $0x148] sm:$0xff]
    %v60 = vld [vmem:[%s0 + $0x150] sm:$0xff]
    %v61 = vld [vmem:[%s0 + $0x158] sm:$0xff]
    %v62 = vld [vmem:[%s0 + $0x160] sm:$0xff]
    %v63 = vld [vmem:[%s0 + $0x168] sm:$0xff]
    %v64 = vld [vmem:[%s0 + $0x170] sm:$0xff]
    %v65 = vld [vmem:[%s0 + $0x178] sm:$0xff]
    %v66 = vld [vmem:[%s0 + $0x180] sm:$0xff]
    %v67 = vld [vmem:[%s0 + $0x188] sm:$0xff]
    %v68 = vld [vmem:[%s0 + $0x190] sm:$0xff]
    %v69 = vld [vmem:[%s0 + $0x198] sm:$0xff]
    %v70 = vld [vmem:[%s0 + $0x1a0] sm:$0xff]
    %v71 = vld [vmem:[%s0 + $0x1a8] sm:$0xff]
    %v72 = vld [vmem:[%s0 + $0x1b0] sm:$0xff]
    %v73 = vld [vmem:[%s0 + $0x1b8] sm:$0xff]
    %v74 = vld [vmem:[%s0 + $0x1c0] sm:$0xff]
    %v75 = vld [vmem:[%s0 + $0x1c8] sm:$0xff]
    %v76 = vld [vmem:[%s0 + $0x1d0] sm:$0xff]
    %v77 = vld [vmem:[%s0 + $0x1d8] sm:$0xff]
    %v78 = vld [vmem:[%s0 + $0x1e0] sm:$0xff]
    %v79 = vld [vmem:[%s0 + $0x1e8] sm:$0xff]
    %v80 = vld [vmem:[%s0 + $0x1f0] sm:$0xff]
    %v81 = vld [vmem:[%s0 + $0x1f8] sm:$0xff]
    %v82 = vld [vmem:[%s1] sm:$0xff]
    %v83 = vld [vmem:[%s1 + $0x8] sm:$0xff]
    %v84 = vld [vmem:[%s1 + $0x10] sm:$0xf]
    %v85 = vld [vmem:[%s1 + $0x14] sm:$0x1]
    %v86 = vlaneseq
    %v87 = vshrl.u32 %v86, 7
    %v88 = vsub.s32 0, %v87
    %v89 = vrot.slane %v85, %v88
    %vm90 = vcmask 162816
    %v92 = vsel %vm90, %v18, 0
    %v95 = vsel %vm90, %v19, 0
    %v98 = vsel %vm90, %v20, 0
    %v101 = vsel %vm90, %v21, 0
    %v104 = vsel %vm90, %v22, 0
    %v107 = vsel %vm90, %v23, 0
    %v110 = vsel %vm90, %v24, 0
    %v113 = vsel %vm90, %v25, 0
    %v116 = vsel %vm90, %v26, 0
    %v119 = vsel %vm90, %v27, 0
    %v122 = vsel %vm90, %v28, 0
    %v125 = vsel %vm90, %v29, 0
    %v128 = vsel %vm90, %v30, 0
    %v131 = vsel %vm90, %v31, 0
    %v134 = vsel %vm90, %v32, 0
    %v137 = vsel %vm90, %v33, 0
    %v140 = vsel %vm90, %v34, 0
    %v143 = vsel %vm90, %v35, 0
    %v146 = vsel %vm90, %v36, 0
    %v149 = vsel %vm90, %v37, 0
    %v152 = vsel %vm90, %v38, 0
    %v155 = vsel %vm90, %v39, 0
    %v158 = vsel %vm90, %v40, 0
    %v161 = vsel %vm90, %v41, 0
    %v164 = vsel %vm90, %v42, 0
    %v167 = vsel %vm90, %v43, 0
    %v170 = vsel %vm90, %v44, 0
    %v173 = vsel %vm90, %v45, 0
    %v176 = vsel %vm90, %v46, 0
    %v179 = vsel %vm90, %v47, 0
    %v182 = vsel %vm90, %v48, 0
    %v185 = vsel %vm90, %v49, 0
    %v188 = vsel %vm90, %v50, 0
    %v191 = vsel %vm90, %v51, 0
    %v194 = vsel %vm90, %v52, 0
    %v197 = vsel %vm90, %v53, 0
    %v200 = vsel %vm90, %v54, 0
    %v203 = vsel %vm90, %v55, 0
    %v206 = vsel %vm90, %v56, 0
    %v209 = vsel %vm90, %v57, 0
    %v212 = vsel %vm90, %v58, 0
    %v215 = vsel %vm90, %v59, 0
    %v218 = vsel %vm90, %v60, 0
    %v221 = vsel %vm90, %v61, 0
    %v224 = vsel %vm90, %v62, 0
    %v227 = vsel %vm90, %v63, 0
    %v230 = vsel %vm90, %v64, 0
    %v233 = vsel %vm90, %v65, 0
    %v236 = vsel %vm90, %v66, 0
    %v239 = vsel %vm90, %v67, 0
    %v242 = vsel %vm90, %v68, 0
    %v245 = vsel %vm90, %v69, 0
    %v248 = vsel %vm90, %v70, 0
    %v251 = vsel %vm90, %v71, 0
    %v254 = vsel %vm90, %v72, 0
    %v257 = vsel %vm90, %v73, 0
    %v260 = vsel %vm90, %v74, 0
    %v263 = vsel %vm90, %v75, 0
    %v266 = vsel %vm90, %v76, 0
    %v269 = vsel %vm90, %v77, 0
    %v272 = vsel %vm90, %v78, 0
    %v275 = vsel %vm90, %v79, 0
    %v278 = vsel %vm90, %v80, 0
    %v281 = vsel %vm90, %v81, 0
    %vm283 = vcmask 1043456
    %v285 = vsel %vm283, %v84, 0
    %287 = vmatprep.subr.mxu0 0.0
    %288 = vmatpush1.msra.mxu0 0.0
    %289 = vmatprep.subr.mxu0 0.0
    %290 = vmatpush1.msra.mxu0 0.0
    %291 = vmatprep.subr.mxu0 0.0
    %292 = vmatpush1.msra.mxu0 0.0
    %293 = vmatprep.subr.mxu0 0.0
    %294 = vmatpush1.msra.mxu0 0.0
    %295 = vmatprep.subr.mxu0 0.0
    %296 = vmatpush1.msra.mxu0 0.0
    %297 = vmatprep.subr.mxu0 0.0
    %298 = vmatpush1.msra.mxu0 0.0
    %299 = vmatprep.subr.mxu0 0.0
    %300 = vmatpush1.msra.mxu0 0.0
    %301 = vmatprep.subr.mxu0 0.0
    %302 = vmatpush1.msra.mxu0 0.0
    %303 = vmatprep.subr.mxu0 0.0
    %304 = vmatpush1.msra.mxu0 0.0
    %305 = vmatprep.subr.mxu0 0.0
    %306 = vmatpush1.msra.mxu0 0.0
    %307 = vmatprep.subr.mxu0 0.0
    %308 = vmatpush1.msra.mxu0 0.0
    %309 = vmatprep.subr.mxu0 0.0
    %310 = vmatpush1.msra.mxu0 0.0
    %311 = vmatprep.subr.mxu0 0.0
    %312 = vmatpush1.msra.mxu0 0.0
    %313 = vmatprep.subr.mxu0 0.0
    %314 = vmatpush1.msra.mxu0 %v285
    %315 = vmatprep.subr.mxu0 0.0
    %316 = vmatpush1.msra.mxu0 %v83
    %317 = vmatprep.subr.mxu0 0.0
    %318 = vmatpush1.msra.mxu0 %v82
    %319 = vmatprep.subr.mxu0 0.0
    %320 = vmatpush2.msra.mxu0 0.0
    %321 = vmatprep.subr.mxu0 0.0
    %322 = vmatpush2.msra.mxu0 0.0
    %323 = vmatprep.subr.mxu0 0.0
    %324 = vmatpush2.msra.mxu0 0.0
    %325 = vmatprep.subr.mxu0 0.0
    %326 = vmatpush2.msra.mxu0 0.0
    %327 = vmatprep.subr.mxu0 0.0
    %328 = vmatpush2.msra.mxu0 0.0
    %329 = vmatprep.subr.mxu0 0.0
    %330 = vmatpush2.msra.mxu0 0.0
    %331 = vmatprep.subr.mxu0 0.0
    %332 = vmatpush2.msra.mxu0 0.0
    %333 = vmatprep.subr.mxu0 0.0
    %334 = vmatpush2.msra.mxu0 0.0
    %335 = vmatprep.subr.mxu0 0.0
    %336 = vmatpush2.msra.mxu0 0.0
    %337 = vmatprep.subr.mxu0 0.0
    %338 = vmatpush2.msra.mxu0 0.0
    %339 = vmatprep.subr.mxu0 0.0
    %340 = vmatpush2.msra.mxu0 0.0
    %341 = vmatprep.subr.mxu0 0.0
    %342 = vmatpush2.msra.mxu0 0.0
    %343 = vmatprep.subr.mxu0 0.0
    %344 = vmatpush2.msra.mxu0 0.0
    %345 = vmatprep.subr.mxu0 0.0
    %346 = vmatpush2.msra.mxu0 0.0
    %347 = vmatprep.subr.mxu0 0.0
    %348 = vmatpush2.msra.mxu0 0.0
    %349 = vmatprep.subr.mxu0 0.0
    %350 = vmatpush2.msra.mxu0 0.0
    %351 = vmatprep.mubr.f32.mxu0 0.0
    %352 = vmatmul.mubr.f32.gmra.mxu0 %v92
    %v353 = vpop.f32.mrf.mxu0
    %v354 = vadd.f32 %v89, %v353
    %v355 = vpop.f32.mrf.mxu0
    %356 = vmatprep.mubr.f32.mxu0 0.0
    %357 = vmatmul.mubr.f32.gmra.mxu0 %v95
    %v358 = vpop.f32.mrf.mxu0
    %v359 = vadd.f32 %v89, %v358
    %v360 = vpop.f32.mrf.mxu0
    %361 = vmatprep.mubr.f32.mxu0 0.0
    %362 = vmatmul.mubr.f32.gmra.mxu0 %v98
    %v363 = vpop.f32.mrf.mxu0
    %v364 = vadd.f32 %v89, %v363
    %v365 = vpop.f32.mrf.mxu0
    %366 = vmatprep.mubr.f32.mxu0 0.0
    %367 = vmatmul.mubr.f32.gmra.mxu0 %v101
    %v368 = vpop.f32.mrf.mxu0
    %v369 = vadd.f32 %v89, %v368
    %v370 = vpop.f32.mrf.mxu0
    %371 = vmatprep.mubr.f32.mxu0 0.0
    %372 = vmatmul.mubr.f32.gmra.mxu0 %v104
    %v373 = vpop.f32.mrf.mxu0
    %v374 = vadd.f32 %v89, %v373
    %v375 = vpop.f32.mrf.mxu0
    %376 = vmatprep.mubr.f32.mxu0 0.0
    %377 = vmatmul.mubr.f32.gmra.mxu0 %v107
    %v378 = vpop.f32.mrf.mxu0
    %v379 = vadd.f32 %v89, %v378
    %v380 = vpop.f32.mrf.mxu0
    %381 = vmatprep.mubr.f32.mxu0 0.0
    %382 = vmatmul.mubr.f32.gmra.mxu0 %v110
    %v383 = vpop.f32.mrf.mxu0
    %v384 = vadd.f32 %v89, %v383
    %v385 = vpop.f32.mrf.mxu0
    %386 = vmatprep.mubr.f32.mxu0 0.0
    %387 = vmatmul.mubr.f32.gmra.mxu0 %v113
    %v388 = vpop.f32.mrf.mxu0
    %v389 = vadd.f32 %v89, %v388
    %v390 = vpop.f32.mrf.mxu0
    %391 = vmatprep.mubr.f32.mxu0 0.0
    %392 = vmatmul.mubr.f32.gmra.mxu0 %v116
    %v393 = vpop.f32.mrf.mxu0
    %v394 = vadd.f32 %v89, %v393
    %v395 = vpop.f32.mrf.mxu0
    %396 = vmatprep.mubr.f32.mxu0 0.0
    %397 = vmatmul.mubr.f32.gmra.mxu0 %v119
    %v398 = vpop.f32.mrf.mxu0
    %v399 = vadd.f32 %v89, %v398
    %v400 = vpop.f32.mrf.mxu0
    %401 = vmatprep.mubr.f32.mxu0 0.0
    %402 = vmatmul.mubr.f32.gmra.mxu0 %v122
    %v403 = vpop.f32.mrf.mxu0
    %v404 = vadd.f32 %v89, %v403
    %v405 = vpop.f32.mrf.mxu0
    %406 = vmatprep.mubr.f32.mxu0 0.0
    %407 = vmatmul.mubr.f32.gmra.mxu0 %v125
    %v408 = vpop.f32.mrf.mxu0
    %v409 = vadd.f32 %v89, %v408
    %v410 = vpop.f32.mrf.mxu0
    %411 = vmatprep.mubr.f32.mxu0 0.0
    %412 = vmatmul.mubr.f32.gmra.mxu0 %v128
    %v413 = vpop.f32.mrf.mxu0
    %v414 = vadd.f32 %v89, %v413
    %v415 = vpop.f32.mrf.mxu0
    %416 = vmatprep.mubr.f32.mxu0 0.0
    %417 = vmatmul.mubr.f32.gmra.mxu0 %v131
    %v418 = vpop.f32.mrf.mxu0
    %v419 = vadd.f32 %v89, %v418
    %v420 = vpop.f32.mrf.mxu0
    %421 = vmatprep.mubr.f32.mxu0 0.0
    %422 = vmatmul.mubr.f32.gmra.mxu0 %v134
    %v423 = vpop.f32.mrf.mxu0
    %v424 = vadd.f32 %v89, %v423
    %v425 = vpop.f32.mrf.mxu0
    %426 = vmatprep.mubr.f32.mxu0 0.0
    %427 = vmatmul.mubr.f32.gmra.mxu0 %v137
    %v428 = vpop.f32.mrf.mxu0
    %v429 = vadd.f32 %v89, %v428
    %v430 = vpop.f32.mrf.mxu0
    %431 = vmatprep.mubr.f32.mxu0 0.0
    %432 = vmatmul.mubr.f32.gmra.mxu0 %v140
    %v433 = vpop.f32.mrf.mxu0
    %v434 = vadd.f32 %v89, %v433
    %v435 = vpop.f32.mrf.mxu0
    %436 = vmatprep.mubr.f32.mxu0 0.0
    %437 = vmatmul.mubr.f32.gmra.mxu0 %v143
    %v438 = vpop.f32.mrf.mxu0
    %v439 = vadd.f32 %v89, %v438
    %v440 = vpop.f32.mrf.mxu0
    %441 = vmatprep.mubr.f32.mxu0 0.0
    %442 = vmatmul.mubr.f32.gmra.mxu0 %v146
    %v443 = vpop.f32.mrf.mxu0
    %v444 = vadd.f32 %v89, %v443
    %v445 = vpop.f32.mrf.mxu0
    %446 = vmatprep.mubr.f32.mxu0 0.0
    %447 = vmatmul.mubr.f32.gmra.mxu0 %v149
    %v448 = vpop.f32.mrf.mxu0
    %v449 = vadd.f32 %v89, %v448
    %v450 = vpop.f32.mrf.mxu0
    %451 = vmatprep.mubr.f32.mxu0 0.0
    %452 = vmatmul.mubr.f32.gmra.mxu0 %v152
    %v453 = vpop.f32.mrf.mxu0
    %v454 = vadd.f32 %v89, %v453
    %v455 = vpop.f32.mrf.mxu0
    %456 = vmatprep.mubr.f32.mxu0 0.0
    %457 = vmatmul.mubr.f32.gmra.mxu0 %v155
    %v458 = vpop.f32.mrf.mxu0
    %v459 = vadd.f32 %v89, %v458
    %v460 = vpop.f32.mrf.mxu0
    %461 = vmatprep.mubr.f32.mxu0 0.0
    %462 = vmatmul.mubr.f32.gmra.mxu0 %v158
    %v463 = vpop.f32.mrf.mxu0
    %v464 = vadd.f32 %v89, %v463
    %v465 = vpop.f32.mrf.mxu0
    %466 = vmatprep.mubr.f32.mxu0 0.0
    %467 = vmatmul.mubr.f32.gmra.mxu0 %v161
    %v468 = vpop.f32.mrf.mxu0
    %v469 = vadd.f32 %v89, %v468
    %v470 = vpop.f32.mrf.mxu0
    %471 = vmatprep.mubr.f32.mxu0 0.0
    %472 = vmatmul.mubr.f32.gmra.mxu0 %v164
    %v473 = vpop.f32.mrf.mxu0
    %v474 = vadd.f32 %v89, %v473
    %v475 = vpop.f32.mrf.mxu0
    %476 = vmatprep.mubr.f32.mxu0 0.0
    %477 = vmatmul.mubr.f32.gmra.mxu0 %v167
    %v478 = vpop.f32.mrf.mxu0
    %v479 = vadd.f32 %v89, %v478
    %v480 = vpop.f32.mrf.mxu0
    %481 = vmatprep.mubr.f32.mxu0 0.0
    %482 = vmatmul.mubr.f32.gmra.mxu0 %v170
    %v483 = vpop.f32.mrf.mxu0
    %v484 = vadd.f32 %v89, %v483
    %v485 = vpop.f32.mrf.mxu0
    %486 = vmatprep.mubr.f32.mxu0 0.0
    %487 = vmatmul.mubr.f32.gmra.mxu0 %v173
    %v488 = vpop.f32.mrf.mxu0
    %v489 = vadd.f32 %v89, %v488
    %v490 = vpop.f32.mrf.mxu0
    %491 = vmatprep.mubr.f32.mxu0 0.0
    %492 = vmatmul.mubr.f32.gmra.mxu0 %v176
    %v493 = vpop.f32.mrf.mxu0
    %v494 = vadd.f32 %v89, %v493
    %v495 = vpop.f32.mrf.mxu0
    %496 = vmatprep.mubr.f32.mxu0 0.0
    %497 = vmatmul.mubr.f32.gmra.mxu0 %v179
    %v498 = vpop.f32.mrf.mxu0
    %v499 = vadd.f32 %v89, %v498
    %v500 = vpop.f32.mrf.mxu0
    %501 = vmatprep.mubr.f32.mxu0 0.0
    %502 = vmatmul.mubr.f32.gmra.mxu0 %v182
    %v503 = vpop.f32.mrf.mxu0
    %v504 = vadd.f32 %v89, %v503
    %v505 = vpop.f32.mrf.mxu0
    %506 = vmatprep.mubr.f32.mxu0 0.0
    %507 = vmatmul.mubr.f32.gmra.mxu0 %v185
    %v508 = vpop.f32.mrf.mxu0
    %v509 = vadd.f32 %v89, %v508
    %v510 = vpop.f32.mrf.mxu0
    %511 = vmatprep.mubr.f32.mxu0 0.0
    %512 = vmatmul.mubr.f32.gmra.mxu0 %v188
    %v513 = vpop.f32.mrf.mxu0
    %v514 = vadd.f32 %v89, %v513
    %v515 = vpop.f32.mrf.mxu0
    %516 = vmatprep.mubr.f32.mxu0 0.0
    %517 = vmatmul.mubr.f32.gmra.mxu0 %v191
    %v518 = vpop.f32.mrf.mxu0
    %v519 = vadd.f32 %v89, %v518
    %v520 = vpop.f32.mrf.mxu0
    %521 = vmatprep.mubr.f32.mxu0 0.0
    %522 = vmatmul.mubr.f32.gmra.mxu0 %v194
    %v523 = vpop.f32.mrf.mxu0
    %v524 = vadd.f32 %v89, %v523
    %v525 = vpop.f32.mrf.mxu0
    %526 = vmatprep.mubr.f32.mxu0 0.0
    %527 = vmatmul.mubr.f32.gmra.mxu0 %v197
    %v528 = vpop.f32.mrf.mxu0
    %v529 = vadd.f32 %v89, %v528
    %v530 = vpop.f32.mrf.mxu0
    %531 = vmatprep.mubr.f32.mxu0 0.0
    %532 = vmatmul.mubr.f32.gmra.mxu0 %v200
    %v533 = vpop.f32.mrf.mxu0
    %v534 = vadd.f32 %v89, %v533
    %v535 = vpop.f32.mrf.mxu0
    %536 = vmatprep.mubr.f32.mxu0 0.0
    %537 = vmatmul.mubr.f32.gmra.mxu0 %v203
    %v538 = vpop.f32.mrf.mxu0
    %v539 = vadd.f32 %v89, %v538
    %v540 = vpop.f32.mrf.mxu0
    %541 = vmatprep.mubr.f32.mxu0 0.0
    %542 = vmatmul.mubr.f32.gmra.mxu0 %v206
    %v543 = vpop.f32.mrf.mxu0
    %v544 = vadd.f32 %v89, %v543
    %v545 = vpop.f32.mrf.mxu0
    %546 = vmatprep.mubr.f32.mxu0 0.0
    %547 = vmatmul.mubr.f32.gmra.mxu0 %v209
    %v548 = vpop.f32.mrf.mxu0
    %v549 = vadd.f32 %v89, %v548
    %v550 = vpop.f32.mrf.mxu0
    %551 = vmatprep.mubr.f32.mxu0 0.0
    %552 = vmatmul.mubr.f32.gmra.mxu0 %v212
    %v553 = vpop.f32.mrf.mxu0
    %v554 = vadd.f32 %v89, %v553
    %v555 = vpop.f32.mrf.mxu0
    %556 = vmatprep.mubr.f32.mxu0 0.0
    %557 = vmatmul.mubr.f32.gmra.mxu0 %v215
    %v558 = vpop.f32.mrf.mxu0
    %v559 = vadd.f32 %v89, %v558
    %v560 = vpop.f32.mrf.mxu0
    %561 = vmatprep.mubr.f32.mxu0 0.0
    %562 = vmatmul.mubr.f32.gmra.mxu0 %v218
    %v563 = vpop.f32.mrf.mxu0
    %v564 = vadd.f32 %v89, %v563
    %v565 = vpop.f32.mrf.mxu0
    %566 = vmatprep.mubr.f32.mxu0 0.0
    %567 = vmatmul.mubr.f32.gmra.mxu0 %v221
    %v568 = vpop.f32.mrf.mxu0
    %v569 = vadd.f32 %v89, %v568
    %v570 = vpop.f32.mrf.mxu0
    %571 = vmatprep.mubr.f32.mxu0 0.0
    %572 = vmatmul.mubr.f32.gmra.mxu0 %v224
    %v573 = vpop.f32.mrf.mxu0
    %v574 = vadd.f32 %v89, %v573
    %v575 = vpop.f32.mrf.mxu0
    %576 = vmatprep.mubr.f32.mxu0 0.0
    %577 = vmatmul.mubr.f32.gmra.mxu0 %v227
    %v578 = vpop.f32.mrf.mxu0
    %v579 = vadd.f32 %v89, %v578
    %v580 = vpop.f32.mrf.mxu0
    %581 = vmatprep.mubr.f32.mxu0 0.0
    %582 = vmatmul.mubr.f32.gmra.mxu0 %v230
    %v583 = vpop.f32.mrf.mxu0
    %v584 = vadd.f32 %v89, %v583
    %v585 = vpop.f32.mrf.mxu0
    %586 = vmatprep.mubr.f32.mxu0 0.0
    %587 = vmatmul.mubr.f32.gmra.mxu0 %v233
    %v588 = vpop.f32.mrf.mxu0
    %v589 = vadd.f32 %v89, %v588
    %v590 = vpop.f32.mrf.mxu0
    %591 = vmatprep.mubr.f32.mxu0 0.0
    %592 = vmatmul.mubr.f32.gmra.mxu0 %v236
    %v593 = vpop.f32.mrf.mxu0
    %v594 = vadd.f32 %v89, %v593
    %v595 = vpop.f32.mrf.mxu0
    %596 = vmatprep.mubr.f32.mxu0 0.0
    %597 = vmatmul.mubr.f32.gmra.mxu0 %v239
    %v598 = vpop.f32.mrf.mxu0
    %v599 = vadd.f32 %v89, %v598
    %v600 = vpop.f32.mrf.mxu0
    %601 = vmatprep.mubr.f32.mxu0 0.0
    %602 = vmatmul.mubr.f32.gmra.mxu0 %v242
    %v603 = vpop.f32.mrf.mxu0
    %v604 = vadd.f32 %v89, %v603
    %v605 = vpop.f32.mrf.mxu0
    %606 = vmatprep.mubr.f32.mxu0 0.0
    %607 = vmatmul.mubr.f32.gmra.mxu0 %v245
    %v608 = vpop.f32.mrf.mxu0
    %v609 = vadd.f32 %v89, %v608
    %v610 = vpop.f32.mrf.mxu0
    %611 = vmatprep.mubr.f32.mxu0 0.0
    %612 = vmatmul.mubr.f32.gmra.mxu0 %v248
    %v613 = vpop.f32.mrf.mxu0
    %v614 = vadd.f32 %v89, %v613
    %v615 = vpop.f32.mrf.mxu0
    %616 = vmatprep.mubr.f32.mxu0 0.0
    %617 = vmatmul.mubr.f32.gmra.mxu0 %v251
    %v618 = vpop.f32.mrf.mxu0
    %v619 = vadd.f32 %v89, %v618
    %v620 = vpop.f32.mrf.mxu0
    %621 = vmatprep.mubr.f32.mxu0 0.0
    %622 = vmatmul.mubr.f32.gmra.mxu0 %v254
    %v623 = vpop.f32.mrf.mxu0
    %v624 = vadd.f32 %v89, %v623
    %v625 = vpop.f32.mrf.mxu0
    %626 = vmatprep.mubr.f32.mxu0 0.0
    %627 = vmatmul.mubr.f32.gmra.mxu0 %v257
    %v628 = vpop.f32.mrf.mxu0
    %v629 = vadd.f32 %v89, %v628
    %v630 = vpop.f32.mrf.mxu0
    %631 = vmatprep.mubr.f32.mxu0 0.0
    %632 = vmatmul.mubr.f32.gmra.mxu0 %v260
    %v633 = vpop.f32.mrf.mxu0
    %v634 = vadd.f32 %v89, %v633
    %v635 = vpop.f32.mrf.mxu0
    %636 = vmatprep.mubr.f32.mxu0 0.0
    %637 = vmatmul.mubr.f32.gmra.mxu0 %v263
    %v638 = vpop.f32.mrf.mxu0
    %v639 = vadd.f32 %v89, %v638
    %v640 = vpop.f32.mrf.mxu0
    %641 = vmatprep.mubr.f32.mxu0 0.0
    %642 = vmatmul.mubr.f32.gmra.mxu0 %v266
    %v643 = vpop.f32.mrf.mxu0
    %v644 = vadd.f32 %v89, %v643
    %v645 = vpop.f32.mrf.mxu0
    %646 = vmatprep.mubr.f32.mxu0 0.0
    %647 = vmatmul.mubr.f32.gmra.mxu0 %v269
    %v648 = vpop.f32.mrf.mxu0
    %v649 = vadd.f32 %v89, %v648
    %v650 = vpop.f32.mrf.mxu0
    %651 = vmatprep.mubr.f32.mxu0 0.0
    %652 = vmatmul.mubr.f32.gmra.mxu0 %v272
    %v653 = vpop.f32.mrf.mxu0
    %v654 = vadd.f32 %v89, %v653
    %v655 = vpop.f32.mrf.mxu0
    %656 = vmatprep.mubr.f32.mxu0 0.0
    %657 = vmatmul.mubr.f32.gmra.mxu0 %v275
    %v658 = vpop.f32.mrf.mxu0
    %v659 = vadd.f32 %v89, %v658
    %v660 = vpop.f32.mrf.mxu0
    %661 = vmatprep.mubr.f32.mxu0 0.0
    %662 = vmatmul.mubr.f32.gmra.mxu0 %v278
    %v663 = vpop.f32.mrf.mxu0
    %v664 = vadd.f32 %v89, %v663
    %v665 = vpop.f32.mrf.mxu0
    %666 = vmatprep.mubr.f32.mxu0 0.0
    %667 = vmatmul.mubr.f32.gmra.mxu0 %v281
    %v668 = vpop.f32.mrf.mxu0
    %v669 = vadd.f32 %v89, %v668
    %v670 = vpop.f32.mrf.mxu0
    %671 = vdwg.mxu0
    %v672 = vmax.f32 %v354, 0.0
    %v673 = vmax.f32 %v359, 0.0
    %v674 = vmax.f32 %v364, 0.0
    %v675 = vmax.f32 %v369, 0.0
    %v676 = vmax.f32 %v374, 0.0
    %v677 = vmax.f32 %v379, 0.0
    %v678 = vmax.f32 %v384, 0.0
    %v679 = vmax.f32 %v389, 0.0
    %v680 = vmax.f32 %v394, 0.0
    %v681 = vmax.f32 %v399, 0.0
    %v682 = vmax.f32 %v404, 0.0
    %v683 = vmax.f32 %v409, 0.0
    %v684 = vmax.f32 %v414, 0.0
    %v685 = vmax.f32 %v419, 0.0
    %v686 = vmax.f32 %v424, 0.0
    %v687 = vmax.f32 %v429, 0.0
    %v688 = vmax.f32 %v434, 0.0
    %v689 = vmax.f32 %v439, 0.0
    %v690 = vmax.f32 %v444, 0.0
    %v691 = vmax.f32 %v449, 0.0
    %v692 = vmax.f32 %v454, 0.0
    %v693 = vmax.f32 %v459, 0.0
    %v694 = vmax.f32 %v464, 0.0
    %v695 = vmax.f32 %v469, 0.0
    %v696 = vmax.f32 %v474, 0.0
    %v697 = vmax.f32 %v479, 0.0
    %v698 = vmax.f32 %v484, 0.0
    %v699 = vmax.f32 %v489, 0.0
    %v700 = vmax.f32 %v494, 0.0
    %v701 = vmax.f32 %v499, 0.0
    %v702 = vmax.f32 %v504, 0.0
    %v703 = vmax.f32 %v509, 0.0
    %v704 = vmax.f32 %v514, 0.0
    %v705 = vmax.f32 %v519, 0.0
    %v706 = vmax.f32 %v524, 0.0
    %v707 = vmax.f32 %v529, 0.0
    %v708 = vmax.f32 %v534, 0.0
    %v709 = vmax.f32 %v539, 0.0
    %v710 = vmax.f32 %v544, 0.0
    %v711 = vmax.f32 %v549, 0.0
    %v712 = vmax.f32 %v554, 0.0
    %v713 = vmax.f32 %v559, 0.0
    %v714 = vmax.f32 %v564, 0.0
    %v715 = vmax.f32 %v569, 0.0
    %v716 = vmax.f32 %v574, 0.0
    %v717 = vmax.f32 %v579, 0.0
    %v718 = vmax.f32 %v584, 0.0
    %v719 = vmax.f32 %v589, 0.0
    %v720 = vmax.f32 %v594, 0.0
    %v721 = vmax.f32 %v599, 0.0
    %v722 = vmax.f32 %v604, 0.0
    %v723 = vmax.f32 %v609, 0.0
    %v724 = vmax.f32 %v614, 0.0
    %v725 = vmax.f32 %v619, 0.0
    %v726 = vmax.f32 %v624, 0.0
    %v727 = vmax.f32 %v629, 0.0
    %v728 = vmax.f32 %v634, 0.0
    %v729 = vmax.f32 %v639, 0.0
    %v730 = vmax.f32 %v644, 0.0
    %v731 = vmax.f32 %v649, 0.0
    %v732 = vmax.f32 %v654, 0.0
    %v733 = vmax.f32 %v659, 0.0
    %v734 = vmax.f32 %v664, 0.0
    %v735 = vmax.f32 %v669, 0.0
    %vm736 = vcmask 130048
    %737 = vst.msk [vmem:[#allocation2] sm:$0xff] %vm736, %v672
    %738 = vst.msk [vmem:[#allocation2 + $0x8] sm:$0xff] %vm736, %v673
    %739 = vst.msk [vmem:[#allocation2 + $0x10] sm:$0xff] %vm736, %v674
    %740 = vst.msk [vmem:[#allocation2 + $0x18] sm:$0xff] %vm736, %v675
    %741 = vst.msk [vmem:[#allocation2 + $0x20] sm:$0xff] %vm736, %v676
    %742 = vst.msk [vmem:[#allocation2 + $0x28] sm:$0xff] %vm736, %v677
    %743 = vst.msk [vmem:[#allocation2 + $0x30] sm:$0xff] %vm736, %v678
    %744 = vst.msk [vmem:[#allocation2 + $0x38] sm:$0xff] %vm736, %v679
    %745 = vst.msk [vmem:[#allocation2 + $0x40] sm:$0xff] %vm736, %v680
    %746 = vst.msk [vmem:[#allocation2 + $0x48] sm:$0xff] %vm736, %v681
    %747 = vst.msk [vmem:[#allocation2 + $0x50] sm:$0xff] %vm736, %v682
    %748 = vst.msk [vmem:[#allocation2 + $0x58] sm:$0xff] %vm736, %v683
    %749 = vst.msk [vmem:[#allocation2 + $0x60] sm:$0xff] %vm736, %v684
    %750 = vst.msk [vmem:[#allocation2 + $0x68] sm:$0xff] %vm736, %v685
    %751 = vst.msk [vmem:[#allocation2 + $0x70] sm:$0xff] %vm736, %v686
    %752 = vst.msk [vmem:[#allocation2 + $0x78] sm:$0xff] %vm736, %v687
    %753 = vst.msk [vmem:[#allocation2 + $0x80] sm:$0xff] %vm736, %v688
    %754 = vst.msk [vmem:[#allocation2 + $0x88] sm:$0xff] %vm736, %v689
    %755 = vst.msk [vmem:[#allocation2 + $0x90] sm:$0xff] %vm736, %v690
    %756 = vst.msk [vmem:[#allocation2 + $0x98] sm:$0xff] %vm736, %v691
    %757 = vst.msk [vmem:[#allocation2 + $0xa0] sm:$0xff] %vm736, %v692
    %758 = vst.msk [vmem:[#allocation2 + $0xa8] sm:$0xff] %vm736, %v693
    %759 = vst.msk [vmem:[#allocation2 + $0xb0] sm:$0xff] %vm736, %v694
    %760 = vst.msk [vmem:[#allocation2 + $0xb8] sm:$0xff] %vm736, %v695
    %761 = vst.msk [vmem:[#allocation2 + $0xc0] sm:$0xff] %vm736, %v696
    %762 = vst.msk [vmem:[#allocation2 + $0xc8] sm:$0xff] %vm736, %v697
    %763 = vst.msk [vmem:[#allocation2 + $0xd0] sm:$0xff] %vm736, %v698
    %764 = vst.msk [vmem:[#allocation2 + $0xd8] sm:$0xff] %vm736, %v699
    %765 = vst.msk [vmem:[#allocation2 + $0xe0] sm:$0xff] %vm736, %v700
    %766 = vst.msk [vmem:[#allocation2 + $0xe8] sm:$0xff] %vm736, %v701
    %767 = vst.msk [vmem:[#allocation2 + $0xf0] sm:$0xff] %vm736, %v702
    %768 = vst.msk [vmem:[#allocation2 + $0xf8] sm:$0xff] %vm736, %v703
    %769 = vst.msk [vmem:[#allocation2 + $0x100] sm:$0xff] %vm736, %v704
    %770 = vst.msk [vmem:[#allocation2 + $0x108] sm:$0xff] %vm736, %v705
    %771 = vst.msk [vmem:[#allocation2 + $0x110] sm:$0xff] %vm736, %v706
    %772 = vst.msk [vmem:[#allocation2 + $0x118] sm:$0xff] %vm736, %v707
    %773 = vst.msk [vmem:[#allocation2 + $0x120] sm:$0xff] %vm736, %v708
    %774 = vst.msk [vmem:[#allocation2 + $0x128] sm:$0xff] %vm736, %v709
    %775 = vst.msk [vmem:[#allocation2 + $0x130] sm:$0xff] %vm736, %v710
    %776 = vst.msk [vmem:[#allocation2 + $0x138] sm:$0xff] %vm736, %v711
    %777 = vst.msk [vmem:[#allocation2 + $0x140] sm:$0xff] %vm736, %v712
    %778 = vst.msk [vmem:[#allocation2 + $0x148] sm:$0xff] %vm736, %v713
    %779 = vst.msk [vmem:[#allocation2 + $0x150] sm:$0xff] %vm736, %v714
    %780 = vst.msk [vmem:[#allocation2 + $0x158] sm:$0xff] %vm736, %v715
    %781 = vst.msk [vmem:[#allocation2 + $0x160] sm:$0xff] %vm736, %v716
    %782 = vst.msk [vmem:[#allocation2 + $0x168] sm:$0xff] %vm736, %v717
    %783 = vst.msk [vmem:[#allocation2 + $0x170] sm:$0xff] %vm736, %v718
    %784 = vst.msk [vmem:[#allocation2 + $0x178] sm:$0xff] %vm736, %v719
    %785 = vst.msk [vmem:[#allocation2 + $0x180] sm:$0xff] %vm736, %v720
    %786 = vst.msk [vmem:[#allocation2 + $0x188] sm:$0xff] %vm736, %v721
    %787 = vst.msk [vmem:[#allocation2 + $0x190] sm:$0xff] %vm736, %v722
    %788 = vst.msk [vmem:[#allocation2 + $0x198] sm:$0xff] %vm736, %v723
    %789 = vst.msk [vmem:[#allocation2 + $0x1a0] sm:$0xff] %vm736, %v724
    %790 = vst.msk [vmem:[#allocation2 + $0x1a8] sm:$0xff] %vm736, %v725
    %791 = vst.msk [vmem:[#allocation2 + $0x1b0] sm:$0xff] %vm736, %v726
    %792 = vst.msk [vmem:[#allocation2 + $0x1b8] sm:$0xff] %vm736, %v727
    %793 = vst.msk [vmem:[#allocation2 + $0x1c0] sm:$0xff] %vm736, %v728
    %794 = vst.msk [vmem:[#allocation2 + $0x1c8] sm:$0xff] %vm736, %v729
    %795 = vst.msk [vmem:[#allocation2 + $0x1d0] sm:$0xff] %vm736, %v730
    %796 = vst.msk [vmem:[#allocation2 + $0x1d8] sm:$0xff] %vm736, %v731
    %797 = vst.msk [vmem:[#allocation2 + $0x1e0] sm:$0xff] %vm736, %v732
    %798 = vst.msk [vmem:[#allocation2 + $0x1e8] sm:$0xff] %vm736, %v733
    %799 = vst.msk [vmem:[#allocation2 + $0x1f0] sm:$0xff] %vm736, %v734
    %800 = vst.msk [vmem:[#allocation2 + $0x1f8] sm:$0xff] %vm736, %v735
    %v801 = vld [vmem:[#allocation2] ss:$4 sm:$0xff]
    %s802 = scalar_lea.vmem [#allocation2], 32
    %v803 = vld [vmem:[%s802] ss:$4 sm:$0xff]
    %s804 = scalar_lea.vmem [#allocation2], 64
    %v805 = vld [vmem:[%s804] ss:$4 sm:$0xff]
    %s806 = scalar_lea.vmem [#allocation2], 96
    %v807 = vld [vmem:[%s806] ss:$4 sm:$0xff]
    %s808 = scalar_lea.vmem [#allocation2], 128
    %v809 = vld [vmem:[%s808] ss:$4 sm:$0xff]
    %s810 = scalar_lea.vmem [#allocation2], 160
    %v811 = vld [vmem:[%s810] ss:$4 sm:$0xff]
    %s812 = scalar_lea.vmem [#allocation2], 192
    %v813 = vld [vmem:[%s812] ss:$4 sm:$0xff]
    %s814 = scalar_lea.vmem [#allocation2], 224
    %v815 = vld [vmem:[%s814] ss:$4 sm:$0xff]
    %s816 = scalar_lea.vmem [#allocation2], 256
    %v817 = vld [vmem:[%s816] ss:$4 sm:$0xff]
    %s818 = scalar_lea.vmem [#allocation2], 288
    %v819 = vld [vmem:[%s818] ss:$4 sm:$0xff]
    %s820 = scalar_lea.vmem [#allocation2], 320
    %v821 = vld [vmem:[%s820] ss:$4 sm:$0xff]
    %s822 = scalar_lea.vmem [#allocation2], 352
    %v823 = vld [vmem:[%s822] ss:$4 sm:$0xff]
    %s824 = scalar_lea.vmem [#allocation2], 384
    %v825 = vld [vmem:[%s824] ss:$4 sm:$0xff]
    %s826 = scalar_lea.vmem [#allocation2], 416
    %v827 = vld [vmem:[%s826] ss:$4 sm:$0xff]
    %s828 = scalar_lea.vmem [#allocation2], 448
    %v829 = vld [vmem:[%s828] ss:$4 sm:$0xff]
    %s830 = scalar_lea.vmem [#allocation2], 480
    %v831 = vld [vmem:[%s830] ss:$4 sm:$0xff]
    %s832 = scalar_lea.vmem [#allocation2], 1
    %v833 = vld [vmem:[%s832] ss:$4 sm:$0xff]
    %s834 = scalar_lea.vmem [#allocation2], 33
    %v835 = vld [vmem:[%s834] ss:$4 sm:$0xff]
    %s836 = scalar_lea.vmem [#allocation2], 65
    %v837 = vld [vmem:[%s836] ss:$4 sm:$0xff]
    %s838 = scalar_lea.vmem [#allocation2], 97
    %v839 = vld [vmem:[%s838] ss:$4 sm:$0xff]
    %s840 = scalar_lea.vmem [#allocation2], 129
    %v841 = vld [vmem:[%s840] ss:$4 sm:$0xff]
    %s842 = scalar_lea.vmem [#allocation2], 161
    %v843 = vld [vmem:[%s842] ss:$4 sm:$0xff]
    %s844 = scalar_lea.vmem [#allocation2], 193
    %v845 = vld [vmem:[%s844] ss:$4 sm:$0xff]
    %s846 = scalar_lea.vmem [#allocation2], 225
    %v847 = vld [vmem:[%s846] ss:$4 sm:$0xff]
    %s848 = scalar_lea.vmem [#allocation2], 257
    %v849 = vld [vmem:[%s848] ss:$4 sm:$0xff]
    %s850 = scalar_lea.vmem [#allocation2], 289
    %v851 = vld [vmem:[%s850] ss:$4 sm:$0xff]
    %s852 = scalar_lea.vmem [#allocation2], 321
    %v853 = vld [vmem:[%s852] ss:$4 sm:$0xff]
    %s854 = scalar_lea.vmem [#allocation2], 353
    %v855 = vld [vmem:[%s854] ss:$4 sm:$0xff]
    %s856 = scalar_lea.vmem [#allocation2], 385
    %v857 = vld [vmem:[%s856] ss:$4 sm:$0xff]
    %s858 = scalar_lea.vmem [#allocation2], 417
    %v859 = vld [vmem:[%s858] ss:$4 sm:$0xff]
    %s860 = scalar_lea.vmem [#allocation2], 449
    %v861 = vld [vmem:[%s860] ss:$4 sm:$0xff]
    %s862 = scalar_lea.vmem [#allocation2], 481
    %v863 = vld [vmem:[%s862] ss:$4 sm:$0xff]
    %v864 = vmax.f32 %v801, %v833
    %v865 = vmax.f32 %v803, %v835
    %v866 = vmax.f32 %v805, %v837
    %v867 = vmax.f32 %v807, %v839
    %v868 = vmax.f32 %v809, %v841
    %v869 = vmax.f32 %v811, %v843
    %v870 = vmax.f32 %v813, %v845
    %v871 = vmax.f32 %v815, %v847
    %v872 = vmax.f32 %v817, %v849
    %v873 = vmax.f32 %v819, %v851
    %v874 = vmax.f32 %v821, %v853
    %v875 = vmax.f32 %v823, %v855
    %v876 = vmax.f32 %v825, %v857
    %v877 = vmax.f32 %v827, %v859
    %v878 = vmax.f32 %v829, %v861
    %v879 = vmax.f32 %v831, %v863
    %s880 = scalar_lea.vmem [#allocation2], 2
    %v881 = vld [vmem:[%s880] ss:$4 sm:$0xff]
    %s882 = scalar_lea.vmem [#allocation2], 34
    %v883 = vld [vmem:[%s882] ss:$4 sm:$0xff]
    %s884 = scalar_lea.vmem [#allocation2], 66
    %v885 = vld [vmem:[%s884] ss:$4 sm:$0xff]
    %s886 = scalar_lea.vmem [#allocation2], 98
    %v887 = vld [vmem:[%s886] ss:$4 sm:$0xff]
    %s888 = scalar_lea.vmem [#allocation2], 130
    %v889 = vld [vmem:[%s888] ss:$4 sm:$0xff]
    %s890 = scalar_lea.vmem [#allocation2], 162
    %v891 = vld [vmem:[%s890] ss:$4 sm:$0xff]
    %s892 = scalar_lea.vmem [#allocation2], 194
    %v893 = vld [vmem:[%s892] ss:$4 sm:$0xff]
    %s894 = scalar_lea.vmem [#allocation2], 226
    %v895 = vld [vmem:[%s894] ss:$4 sm:$0xff]
    %s896 = scalar_lea.vmem [#allocation2], 258
    %v897 = vld [vmem:[%s896] ss:$4 sm:$0xff]
    %s898 = scalar_lea.vmem [#allocation2], 290
    %v899 = vld [vmem:[%s898] ss:$4 sm:$0xff]
    %s900 = scalar_lea.vmem [#allocation2], 322
    %v901 = vld [vmem:[%s900] ss:$4 sm:$0xff]
    %s902 = scalar_lea.vmem [#allocation2], 354
    %v903 = vld [vmem:[%s902] ss:$4 sm:$0xff]
    %s904 = scalar_lea.vmem [#allocation2], 386
    %v905 = vld [vmem:[%s904] ss:$4 sm:$0xff]
    %s906 = scalar_lea.vmem [#allocation2], 418
    %v907 = vld [vmem:[%s906] ss:$4 sm:$0xff]
    %s908 = scalar_lea.vmem [#allocation2], 450
    %v909 = vld [vmem:[%s908] ss:$4 sm:$0xff]
    %s910 = scalar_lea.vmem [#allocation2], 482
    %v911 = vld [vmem:[%s910] ss:$4 sm:$0xff]
    %v912 = vmax.f32 %v864, %v881
    %v913 = vmax.f32 %v865, %v883
    %v914 = vmax.f32 %v866, %v885
    %v915 = vmax.f32 %v867, %v887
    %v916 = vmax.f32 %v868, %v889
    %v917 = vmax.f32 %v869, %v891
    %v918 = vmax.f32 %v870, %v893
    %v919 = vmax.f32 %v871, %v895
    %v920 = vmax.f32 %v872, %v897
    %v921 = vmax.f32 %v873, %v899
    %v922 = vmax.f32 %v874, %v901
    %v923 = vmax.f32 %v875, %v903
    %v924 = vmax.f32 %v876, %v905
    %v925 = vmax.f32 %v877, %v907
    %v926 = vmax.f32 %v878, %v909
    %v927 = vmax.f32 %v879, %v911
    %s928 = scalar_lea.vmem [#allocation2], 3
    %v929 = vld [vmem:[%s928] ss:$4 sm:$0xff]
    %s930 = scalar_lea.vmem [#allocation2], 35
    %v931 = vld [vmem:[%s930] ss:$4 sm:$0xff]
    %s932 = scalar_lea.vmem [#allocation2], 67
    %v933 = vld [vmem:[%s932] ss:$4 sm:$0xff]
    %s934 = scalar_lea.vmem [#allocation2], 99
    %v935 = vld [vmem:[%s934] ss:$4 sm:$0xff]
    %s936 = scalar_lea.vmem [#allocation2], 131
    %v937 = vld [vmem:[%s936] ss:$4 sm:$0xff]
    %s938 = scalar_lea.vmem [#allocation2], 163
    %v939 = vld [vmem:[%s938] ss:$4 sm:$0xff]
    %s940 = scalar_lea.vmem [#allocation2], 195
    %v941 = vld [vmem:[%s940] ss:$4 sm:$0xff]
    %s942 = scalar_lea.vmem [#allocation2], 227
    %v943 = vld [vmem:[%s942] ss:$4 sm:$0xff]
    %s944 = scalar_lea.vmem [#allocation2], 259
    %v945 = vld [vmem:[%s944] ss:$4 sm:$0xff]
    %s946 = scalar_lea.vmem [#allocation2], 291
    %v947 = vld [vmem:[%s946] ss:$4 sm:$0xff]
    %s948 = scalar_lea.vmem [#allocation2], 323
    %v949 = vld [vmem:[%s948] ss:$4 sm:$0xff]
    %s950 = scalar_lea.vmem [#allocation2], 355
    %v951 = vld [vmem:[%s950] ss:$4 sm:$0xff]
    %s952 = scalar_lea.vmem [#allocation2], 387
    %v953 = vld [vmem:[%s952] ss:$4 sm:$0xff]
    %s954 = scalar_lea.vmem [#allocation2], 419
    %v955 = vld [vmem:[%s954] ss:$4 sm:$0xff]
    %s956 = scalar_lea.vmem [#allocation2], 451
    %v957 = vld [vmem:[%s956] ss:$4 sm:$0xff]
    %s958 = scalar_lea.vmem [#allocation2], 483
    %v959 = vld [vmem:[%s958] ss:$4 sm:$0xff]
    %v960 = vmax.f32 %v912, %v929
    %v961 = vmax.f32 %v913, %v931
    %v962 = vmax.f32 %v914, %v933
    %v963 = vmax.f32 %v915, %v935
    %v964 = vmax.f32 %v916, %v937
    %v965 = vmax.f32 %v917, %v939
    %v966 = vmax.f32 %v918, %v941
    %v967 = vmax.f32 %v919, %v943
    %v968 = vmax.f32 %v920, %v945
    %v969 = vmax.f32 %v921, %v947
    %v970 = vmax.f32 %v922, %v949
    %v971 = vmax.f32 %v923, %v951
    %v972 = vmax.f32 %v924, %v953
    %v973 = vmax.f32 %v925, %v955
    %v974 = vmax.f32 %v926, %v957
    %v975 = vmax.f32 %v927, %v959
    %vm976 = vcmask 123904
    %977 = vst.msk [vmem:[#allocation3] sm:$0x3] %vm976, 0.0
    %978 = vst.msk [vmem:[#allocation3 + $0x82] sm:$0x3] %vm976, 0.0
    %979 = vst.msk [vmem:[#allocation3 + $0x2] sm:$0xff] %vm736, %v960
    %980 = vst.msk [vmem:[#allocation3 + $0xa] sm:$0xff] %vm736, %v961
    %981 = vst.msk [vmem:[#allocation3 + $0x12] sm:$0xff] %vm736, %v962
    %982 = vst.msk [vmem:[#allocation3 + $0x1a] sm:$0xff] %vm736, %v963
    %983 = vst.msk [vmem:[#allocation3 + $0x22] sm:$0xff] %vm736, %v964
    %984 = vst.msk [vmem:[#allocation3 + $0x2a] sm:$0xff] %vm736, %v965
    %985 = vst.msk [vmem:[#allocation3 + $0x32] sm:$0xff] %vm736, %v966
    %986 = vst.msk [vmem:[#allocation3 + $0x3a] sm:$0xff] %vm736, %v967
    %987 = vst.msk [vmem:[#allocation3 + $0x42] sm:$0xff] %vm736, %v968
    %988 = vst.msk [vmem:[#allocation3 + $0x4a] sm:$0xff] %vm736, %v969
    %989 = vst.msk [vmem:[#allocation3 + $0x52] sm:$0xff] %vm736, %v970
    %990 = vst.msk [vmem:[#allocation3 + $0x5a] sm:$0xff] %vm736, %v971
    %991 = vst.msk [vmem:[#allocation3 + $0x62] sm:$0xff] %vm736, %v972
    %992 = vst.msk [vmem:[#allocation3 + $0x6a] sm:$0xff] %vm736, %v973
    %993 = vst.msk [vmem:[#allocation3 + $0x72] sm:$0xff] %vm736, %v974
    %994 = vst.msk [vmem:[#allocation3 + $0x7a] sm:$0xff] %vm736, %v975
    %v995 = vlaneseq
    %v996 = vshrl.u32 %v995, 7
    %v997 = vadd.s32 %v996, 8
    %v998 = vadd.s32 %v996, 16
    %v999 = vadd.s32 %v996, 24
    %v1000 = vadd.s32 %v996, 32
    %v1001 = vadd.s32 %v996, 40
    %v1002 = vadd.s32 %v996, 48
    %v1003 = vadd.s32 %v996, 56
    %v1004 = vadd.s32 %v996, 64
    %v1005 = vadd.s32 %v996, 72
    %v1006 = vadd.s32 %v996, 80
    %v1007 = vadd.s32 %v996, 88
    %v1008 = vadd.s32 %v996, 96
    %v1009 = vadd.s32 %v996, 104
    %v1010 = vadd.s32 %v996, 112
    %v1011 = vadd.s32 %v996, 120
    %v1012 = vcvt.s32.f32 %v996
    %v1013 = vcvt.s32.f32 %v997
    %v1014 = vcvt.s32.f32 %v998
    %v1015 = vcvt.s32.f32 %v999
    %v1016 = vcvt.s32.f32 %v1000
    %v1017 = vcvt.s32.f32 %v1001
    %v1018 = vcvt.s32.f32 %v1002
    %v1019 = vcvt.s32.f32 %v1003
    %v1020 = vcvt.s32.f32 %v1004
    %v1021 = vcvt.s32.f32 %v1005
    %v1022 = vcvt.s32.f32 %v1006
    %v1023 = vcvt.s32.f32 %v1007
    %v1024 = vcvt.s32.f32 %v1008
    %v1025 = vcvt.s32.f32 %v1009
    %v1026 = vcvt.s32.f32 %v1010
    %v1027 = vcvt.s32.f32 %v1011
    %v1028 = vadd.f32 %v1012, 0.5
    %v1029 = vadd.f32 %v1013, 0.5
    %v1030 = vadd.f32 %v1014, 0.5
    %v1031 = vadd.f32 %v1015, 0.5
    %v1032 = vadd.f32 %v1016, 0.5
    %v1033 = vadd.f32 %v1017, 0.5
    %v1034 = vadd.f32 %v1018, 0.5
    %v1035 = vadd.f32 %v1019, 0.5
    %v1036 = vadd.f32 %v1020, 0.5
    %v1037 = vadd.f32 %v1021, 0.5
    %v1038 = vadd.f32 %v1022, 0.5
    %v1039 = vadd.f32 %v1023, 0.5
    %v1040 = vadd.f32 %v1024, 0.5
    %v1041 = vadd.f32 %v1025, 0.5
    %v1042 = vadd.f32 %v1026, 0.5
    %v1043 = vadd.f32 %v1027, 0.5
    %v1044 = vmul.f32 %v1028, 0.0625
    %v1045 = vmul.f32 %v1029, 0.0625
    %v1046 = vmul.f32 %v1030, 0.0625
    %v1047 = vmul.f32 %v1031, 0.0625
    %v1048 = vmul.f32 %v1032, 0.0625
    %v1049 = vmul.f32 %v1033, 0.0625
    %v1050 = vmul.f32 %v1034, 0.0625
    %v1051 = vmul.f32 %v1035, 0.0625
    %v1052 = vmul.f32 %v1036, 0.0625
    %v1053 = vmul.f32 %v1037, 0.0625
    %v1054 = vmul.f32 %v1038, 0.0625
    %v1055 = vmul.f32 %v1039, 0.0625
    %v1056 = vmul.f32 %v1040, 0.0625
    %v1057 = vmul.f32 %v1041, 0.0625
    %v1058 = vmul.f32 %v1042, 0.0625
    %v1059 = vmul.f32 %v1043, 0.0625
    %v1060 = vfloor.f32 %v1044
    %v1061 = vfloor.f32 %v1045
    %v1062 = vfloor.f32 %v1046
    %v1063 = vfloor.f32 %v1047
    %v1064 = vfloor.f32 %v1048
    %v1065 = vfloor.f32 %v1049
    %v1066 = vfloor.f32 %v1050
    %v1067 = vfloor.f32 %v1051
    %v1068 = vfloor.f32 %v1052
    %v1069 = vfloor.f32 %v1053
    %v1070 = vfloor.f32 %v1054
    %v1071 = vfloor.f32 %v1055
    %v1072 = vfloor.f32 %v1056
    %v1073 = vfloor.f32 %v1057
    %v1074 = vfloor.f32 %v1058
    %v1075 = vfloor.f32 %v1059
    %v1076 = vmul.f32 %v1060, 16.0
    %v1077 = vmul.f32 %v1061, 16.0
    %v1078 = vmul.f32 %v1062, 16.0
    %v1079 = vmul.f32 %v1063, 16.0
    %v1080 = vmul.f32 %v1064, 16.0
    %v1081 = vmul.f32 %v1065, 16.0
    %v1082 = vmul.f32 %v1066, 16.0
    %v1083 = vmul.f32 %v1067, 16.0
    %v1084 = vmul.f32 %v1068, 16.0
    %v1085 = vmul.f32 %v1069, 16.0
    %v1086 = vmul.f32 %v1070, 16.0
    %v1087 = vmul.f32 %v1071, 16.0
    %v1088 = vmul.f32 %v1072, 16.0
    %v1089 = vmul.f32 %v1073, 16.0
    %v1090 = vmul.f32 %v1074, 16.0
    %v1091 = vmul.f32 %v1075, 16.0
    %v1092 = vsub.f32 %v1012, %v1076
    %v1093 = vsub.f32 %v1013, %v1077
    %v1094 = vsub.f32 %v1014, %v1078
    %v1095 = vsub.f32 %v1015, %v1079
    %v1096 = vsub.f32 %v1016, %v1080
    %v1097 = vsub.f32 %v1017, %v1081
    %v1098 = vsub.f32 %v1018, %v1082
    %v1099 = vsub.f32 %v1019, %v1083
    %v1100 = vsub.f32 %v1020, %v1084
    %v1101 = vsub.f32 %v1021, %v1085
    %v1102 = vsub.f32 %v1022, %v1086
    %v1103 = vsub.f32 %v1023, %v1087
    %v1104 = vsub.f32 %v1024, %v1088
    %v1105 = vsub.f32 %v1025, %v1089
    %v1106 = vsub.f32 %v1026, %v1090
    %v1107 = vsub.f32 %v1027, %v1091
    %v1108 = vld [vmem:[#allocation3] sm:$0xff]
    %v1109 = vld [vmem:[#allocation3 + $0x8] sm:$0xff]
    %v1110 = vld [vmem:[#allocation3 + $0x10] sm:$0xff]
    %v1111 = vld [vmem:[#allocation3 + $0x18] sm:$0xff]
    %v1112 = vld [vmem:[#allocation3 + $0x20] sm:$0xff]
    %v1113 = vld [vmem:[#allocation3 + $0x28] sm:$0xff]
    %v1114 = vld [vmem:[#allocation3 + $0x30] sm:$0xff]
    %v1115 = vld [vmem:[#allocation3 + $0x38] sm:$0xff]
    %v1116 = vld [vmem:[#allocation3 + $0x40] sm:$0xff]
    %v1117 = vld [vmem:[#allocation3 + $0x48] sm:$0xff]
    %v1118 = vld [vmem:[#allocation3 + $0x50] sm:$0xff]
    %v1119 = vld [vmem:[#allocation3 + $0x58] sm:$0xff]
    %v1120 = vld [vmem:[#allocation3 + $0x60] sm:$0xff]
    %v1121 = vld [vmem:[#allocation3 + $0x68] sm:$0xff]
    %v1122 = vld [vmem:[#allocation3 + $0x70] sm:$0xff]
    %v1123 = vld [vmem:[#allocation3 + $0x78] sm:$0xff]
    %v1124 = vadd.f32 %v1092, -2.0
    %v1125 = vadd.f32 %v1093, -2.0
    %v1126 = vadd.f32 %v1094, -2.0
    %v1127 = vadd.f32 %v1095, -2.0
    %v1128 = vadd.f32 %v1096, -2.0
    %v1129 = vadd.f32 %v1097, -2.0
    %v1130 = vadd.f32 %v1098, -2.0
    %v1131 = vadd.f32 %v1099, -2.0
    %v1132 = vadd.f32 %v1100, -2.0
    %v1133 = vadd.f32 %v1101, -2.0
    %v1134 = vadd.f32 %v1102, -2.0
    %v1135 = vadd.f32 %v1103, -2.0
    %v1136 = vadd.f32 %v1104, -2.0
    %v1137 = vadd.f32 %v1105, -2.0
    %v1138 = vadd.f32 %v1106, -2.0
    %v1139 = vadd.f32 %v1107, -2.0
    %vm1140 = vcmp.ge.f32.partialorder %v1124, 0.0
    %vm1141 = vcmp.ge.f32.partialorder %v1125, 0.0
    %vm1142 = vcmp.ge.f32.partialorder %v1126, 0.0
    %vm1143 = vcmp.ge.f32.partialorder %v1127, 0.0
    %vm1144 = vcmp.ge.f32.partialorder %v1128, 0.0
    %vm1145 = vcmp.ge.f32.partialorder %v1129, 0.0
    %vm1146 = vcmp.ge.f32.partialorder %v1130, 0.0
    %vm1147 = vcmp.ge.f32.partialorder %v1131, 0.0
    %vm1148 = vcmp.ge.f32.partialorder %v1132, 0.0
    %vm1149 = vcmp.ge.f32.partialorder %v1133, 0.0
    %vm1150 = vcmp.ge.f32.partialorder %v1134, 0.0
    %vm1151 = vcmp.ge.f32.partialorder %v1135, 0.0
    %vm1152 = vcmp.ge.f32.partialorder %v1136, 0.0
    %vm1153 = vcmp.ge.f32.partialorder %v1137, 0.0
    %vm1154 = vcmp.ge.f32.partialorder %v1138, 0.0
    %vm1155 = vcmp.ge.f32.partialorder %v1139, 0.0
    %vm1156 = vcmp.lt.f32.partialorder %v1124, 16.0
    %vm1157 = vcmp.lt.f32.partialorder %v1125, 16.0
    %vm1158 = vcmp.lt.f32.partialorder %v1126, 16.0
    %vm1159 = vcmp.lt.f32.partialorder %v1127, 16.0
    %vm1160 = vcmp.lt.f32.partialorder %v1128, 16.0
    %vm1161 = vcmp.lt.f32.partialorder %v1129, 16.0
    %vm1162 = vcmp.lt.f32.partialorder %v1130, 16.0
    %vm1163 = vcmp.lt.f32.partialorder %v1131, 16.0
    %vm1164 = vcmp.lt.f32.partialorder %v1132, 16.0
    %vm1165 = vcmp.lt.f32.partialorder %v1133, 16.0
    %vm1166 = vcmp.lt.f32.partialorder %v1134, 16.0
    %vm1167 = vcmp.lt.f32.partialorder %v1135, 16.0
    %vm1168 = vcmp.lt.f32.partialorder %v1136, 16.0
    %vm1169 = vcmp.lt.f32.partialorder %v1137, 16.0
    %vm1170 = vcmp.lt.f32.partialorder %v1138, 16.0
    %vm1171 = vcmp.lt.f32.partialorder %v1139, 16.0
    %vm1172 = vmand %vm1140, %vm1156
    %vm1173 = vmand %vm1141, %vm1157
    %vm1174 = vmand %vm1142, %vm1158
    %vm1175 = vmand %vm1143, %vm1159
    %vm1176 = vmand %vm1144, %vm1160
    %vm1177 = vmand %vm1145, %vm1161
    %vm1178 = vmand %vm1146, %vm1162
    %vm1179 = vmand %vm1147, %vm1163
    %vm1180 = vmand %vm1148, %vm1164
    %vm1181 = vmand %vm1149, %vm1165
    %vm1182 = vmand %vm1150, %vm1166
    %vm1183 = vmand %vm1151, %vm1167
    %vm1184 = vmand %vm1152, %vm1168
    %vm1185 = vmand %vm1153, %vm1169
    %vm1186 = vmand %vm1154, %vm1170
    %vm1187 = vmand %vm1155, %vm1171
    %v1188 = vsel %vm1172, 1, 0
    %v1189 = vsel %vm1173, 1, 0
    %v1190 = vsel %vm1174, 1, 0
    %v1191 = vsel %vm1175, 1, 0
    %v1192 = vsel %vm1176, 1, 0
    %v1193 = vsel %vm1177, 1, 0
    %v1194 = vsel %vm1178, 1, 0
    %v1195 = vsel %vm1179, 1, 0
    %v1196 = vsel %vm1180, 1, 0
    %v1197 = vsel %vm1181, 1, 0
    %v1198 = vsel %vm1182, 1, 0
    %v1199 = vsel %vm1183, 1, 0
    %v1200 = vsel %vm1184, 1, 0
    %v1201 = vsel %vm1185, 1, 0
    %v1202 = vsel %vm1186, 1, 0
    %v1203 = vsel %vm1187, 1, 0
    %v1204 = vcvt.s32.f32 %v1188
    %v1205 = vcvt.s32.f32 %v1189
    %v1206 = vcvt.s32.f32 %v1190
    %v1207 = vcvt.s32.f32 %v1191
    %v1208 = vcvt.s32.f32 %v1192
    %v1209 = vcvt.s32.f32 %v1193
    %v1210 = vcvt.s32.f32 %v1194
    %v1211 = vcvt.s32.f32 %v1195
    %v1212 = vcvt.s32.f32 %v1196
    %v1213 = vcvt.s32.f32 %v1197
    %v1214 = vcvt.s32.f32 %v1198
    %v1215 = vcvt.s32.f32 %v1199
    %v1216 = vcvt.s32.f32 %v1200
    %v1217 = vcvt.s32.f32 %v1201
    %v1218 = vcvt.s32.f32 %v1202
    %v1219 = vcvt.s32.f32 %v1203
    %v1220 = vmul.f32 %v1108, %v1204
    %v1221 = vmul.f32 %v1109, %v1205
    %v1222 = vmul.f32 %v1110, %v1206
    %v1223 = vmul.f32 %v1111, %v1207
    %v1224 = vmul.f32 %v1112, %v1208
    %v1225 = vmul.f32 %v1113, %v1209
    %v1226 = vmul.f32 %v1114, %v1210
    %v1227 = vmul.f32 %v1115, %v1211
    %v1228 = vmul.f32 %v1116, %v1212
    %v1229 = vmul.f32 %v1117, %v1213
    %v1230 = vmul.f32 %v1118, %v1214
    %v1231 = vmul.f32 %v1119, %v1215
    %v1232 = vmul.f32 %v1120, %v1216
    %v1233 = vmul.f32 %v1121, %v1217
    %v1234 = vmul.f32 %v1122, %v1218
    %v1235 = vmul.f32 %v1123, %v1219
    %v1236 = vld [vmem:[#allocation3 + $0x1] sm:$0xff]
    %v1237 = vld [vmem:[#allocation3 + $0x9] sm:$0xff]
    %v1238 = vld [vmem:[#allocation3 + $0x11] sm:$0xff]
    %v1239 = vld [vmem:[#allocation3 + $0x19] sm:$0xff]
    %v1240 = vld [vmem:[#allocation3 + $0x21] sm:$0xff]
    %v1241 = vld [vmem:[#allocation3 + $0x29] sm:$0xff]
    %v1242 = vld [vmem:[#allocation3 + $0x31] sm:$0xff]
    %v1243 = vld [vmem:[#allocation3 + $0x39] sm:$0xff]
    %v1244 = vld [vmem:[#allocation3 + $0x41] sm:$0xff]
    %v1245 = vld [vmem:[#allocation3 + $0x49] sm:$0xff]
    %v1246 = vld [vmem:[#allocation3 + $0x51] sm:$0xff]
    %v1247 = vld [vmem:[#allocation3 + $0x59] sm:$0xff]
    %v1248 = vld [vmem:[#allocation3 + $0x61] sm:$0xff]
    %v1249 = vld [vmem:[#allocation3 + $0x69] sm:$0xff]
    %v1250 = vld [vmem:[#allocation3 + $0x71] sm:$0xff]
    %v1251 = vld [vmem:[#allocation3 + $0x79] sm:$0xff]
    %v1252 = vadd.f32 %v1092, -1.0
    %v1253 = vadd.f32 %v1093, -1.0
    %v1254 = vadd.f32 %v1094, -1.0
    %v1255 = vadd.f32 %v1095, -1.0
    %v1256 = vadd.f32 %v1096, -1.0
    %v1257 = vadd.f32 %v1097, -1.0
    %v1258 = vadd.f32 %v1098, -1.0
    %v1259 = vadd.f32 %v1099, -1.0
    %v1260 = vadd.f32 %v1100, -1.0
    %v1261 = vadd.f32 %v1101, -1.0
    %v1262 = vadd.f32 %v1102, -1.0
    %v1263 = vadd.f32 %v1103, -1.0
    %v1264 = vadd.f32 %v1104, -1.0
    %v1265 = vadd.f32 %v1105, -1.0
    %v1266 = vadd.f32 %v1106, -1.0
    %v1267 = vadd.f32 %v1107, -1.0
    %vm1268 = vcmp.ge.f32.partialorder %v1252, 0.0
    %vm1269 = vcmp.ge.f32.partialorder %v1253, 0.0
    %vm1270 = vcmp.ge.f32.partialorder %v1254, 0.0
    %vm1271 = vcmp.ge.f32.partialorder %v1255, 0.0
    %vm1272 = vcmp.ge.f32.partialorder %v1256, 0.0
    %vm1273 = vcmp.ge.f32.partialorder %v1257, 0.0
    %vm1274 = vcmp.ge.f32.partialorder %v1258, 0.0
    %vm1275 = vcmp.ge.f32.partialorder %v1259, 0.0
    %vm1276 = vcmp.ge.f32.partialorder %v1260, 0.0
    %vm1277 = vcmp.ge.f32.partialorder %v1261, 0.0
    %vm1278 = vcmp.ge.f32.partialorder %v1262, 0.0
    %vm1279 = vcmp.ge.f32.partialorder %v1263, 0.0
    %vm1280 = vcmp.ge.f32.partialorder %v1264, 0.0
    %vm1281 = vcmp.ge.f32.partialorder %v1265, 0.0
    %vm1282 = vcmp.ge.f32.partialorder %v1266, 0.0
    %vm1283 = vcmp.ge.f32.partialorder %v1267, 0.0
    %vm1284 = vcmp.lt.f32.partialorder %v1252, 16.0
    %vm1285 = vcmp.lt.f32.partialorder %v1253, 16.0
    %vm1286 = vcmp.lt.f32.partialorder %v1254, 16.0
    %vm1287 = vcmp.lt.f32.partialorder %v1255, 16.0
    %vm1288 = vcmp.lt.f32.partialorder %v1256, 16.0
    %vm1289 = vcmp.lt.f32.partialorder %v1257, 16.0
    %vm1290 = vcmp.lt.f32.partialorder %v1258, 16.0
    %vm1291 = vcmp.lt.f32.partialorder %v1259, 16.0
    %vm1292 = vcmp.lt.f32.partialorder %v1260, 16.0
    %vm1293 = vcmp.lt.f32.partialorder %v1261, 16.0
    %vm1294 = vcmp.lt.f32.partialorder %v1262, 16.0
    %vm1295 = vcmp.lt.f32.partialorder %v1263, 16.0
    %vm1296 = vcmp.lt.f32.partialorder %v1264, 16.0
    %vm1297 = vcmp.lt.f32.partialorder %v1265, 16.0
    %vm1298 = vcmp.lt.f32.partialorder %v1266, 16.0
    %vm1299 = vcmp.lt.f32.partialorder %v1267, 16.0
    %vm1300 = vmand %vm1268, %vm1284
    %vm1301 = vmand %vm1269, %vm1285
    %vm1302 = vmand %vm1270, %vm1286
    %vm1303 = vmand %vm1271, %vm1287
    %vm1304 = vmand %vm1272, %vm1288
    %vm1305 = vmand %vm1273, %vm1289
    %vm1306 = vmand %vm1274, %vm1290
    %vm1307 = vmand %vm1275, %vm1291
    %vm1308 = vmand %vm1276, %vm1292
    %vm1309 = vmand %vm1277, %vm1293
    %vm1310 = vmand %vm1278, %vm1294
    %vm1311 = vmand %vm1279, %vm1295
    %vm1312 = vmand %vm1280, %vm1296
    %vm1313 = vmand %vm1281, %vm1297
    %vm1314 = vmand %vm1282, %vm1298
    %vm1315 = vmand %vm1283, %vm1299
    %v1316 = vsel %vm1300, 1, 0
    %v1317 = vsel %vm1301, 1, 0
    %v1318 = vsel %vm1302, 1, 0
    %v1319 = vsel %vm1303, 1, 0
    %v1320 = vsel %vm1304, 1, 0
    %v1321 = vsel %vm1305, 1, 0
    %v1322 = vsel %vm1306, 1, 0
    %v1323 = vsel %vm1307, 1, 0
    %v1324 = vsel %vm1308, 1, 0
    %v1325 = vsel %vm1309, 1, 0
    %v1326 = vsel %vm1310, 1, 0
    %v1327 = vsel %vm1311, 1, 0
    %v1328 = vsel %vm1312, 1, 0
    %v1329 = vsel %vm1313, 1, 0
    %v1330 = vsel %vm1314, 1, 0
    %v1331 = vsel %vm1315, 1, 0
    %v1332 = vcvt.s32.f32 %v1316
    %v1333 = vcvt.s32.f32 %v1317
    %v1334 = vcvt.s32.f32 %v1318
    %v1335 = vcvt.s32.f32 %v1319
    %v1336 = vcvt.s32.f32 %v1320
    %v1337 = vcvt.s32.f32 %v1321
    %v1338 = vcvt.s32.f32 %v1322
    %v1339 = vcvt.s32.f32 %v1323
    %v1340 = vcvt.s32.f32 %v1324
    %v1341 = vcvt.s32.f32 %v1325
    %v1342 = vcvt.s32.f32 %v1326
    %v1343 = vcvt.s32.f32 %v1327
    %v1344 = vcvt.s32.f32 %v1328
    %v1345 = vcvt.s32.f32 %v1329
    %v1346 = vcvt.s32.f32 %v1330
    %v1347 = vcvt.s32.f32 %v1331
    %v1348 = vmul.f32 %v1236, %v1332
    %v1349 = vmul.f32 %v1237, %v1333
    %v1350 = vmul.f32 %v1238, %v1334
    %v1351 = vmul.f32 %v1239, %v1335
    %v1352 = vmul.f32 %v1240, %v1336
    %v1353 = vmul.f32 %v1241, %v1337
    %v1354 = vmul.f32 %v1242, %v1338
    %v1355 = vmul.f32 %v1243, %v1339
    %v1356 = vmul.f32 %v1244, %v1340
    %v1357 = vmul.f32 %v1245, %v1341
    %v1358 = vmul.f32 %v1246, %v1342
    %v1359 = vmul.f32 %v1247, %v1343
    %v1360 = vmul.f32 %v1248, %v1344
    %v1361 = vmul.f32 %v1249, %v1345
    %v1362 = vmul.f32 %v1250, %v1346
    %v1363 = vmul.f32 %v1251, %v1347
    %v1364 = vld [vmem:[#allocation3 + $0x2] sm:$0xff]
    %v1365 = vld [vmem:[#allocation3 + $0xa] sm:$0xff]
    %v1366 = vld [vmem:[#allocation3 + $0x12] sm:$0xff]
    %v1367 = vld [vmem:[#allocation3 + $0x1a] sm:$0xff]
    %v1368 = vld [vmem:[#allocation3 + $0x22] sm:$0xff]
    %v1369 = vld [vmem:[#allocation3 + $0x2a] sm:$0xff]
    %v1370 = vld [vmem:[#allocation3 + $0x32] sm:$0xff]
    %v1371 = vld [vmem:[#allocation3 + $0x3a] sm:$0xff]
    %v1372 = vld [vmem:[#allocation3 + $0x42] sm:$0xff]
    %v1373 = vld [vmem:[#allocation3 + $0x4a] sm:$0xff]
    %v1374 = vld [vmem:[#allocation3 + $0x52] sm:$0xff]
    %v1375 = vld [vmem:[#allocation3 + $0x5a] sm:$0xff]
    %v1376 = vld [vmem:[#allocation3 + $0x62] sm:$0xff]
    %v1377 = vld [vmem:[#allocation3 + $0x6a] sm:$0xff]
    %v1378 = vld [vmem:[#allocation3 + $0x72] sm:$0xff]
    %v1379 = vld [vmem:[#allocation3 + $0x7a] sm:$0xff]
    %v1380 = vld [vmem:[#allocation3 + $0x3] sm:$0xff]
    %v1381 = vld [vmem:[#allocation3 + $0xb] sm:$0xff]
    %v1382 = vld [vmem:[#allocation3 + $0x13] sm:$0xff]
    %v1383 = vld [vmem:[#allocation3 + $0x1b] sm:$0xff]
    %v1384 = vld [vmem:[#allocation3 + $0x23] sm:$0xff]
    %v1385 = vld [vmem:[#allocation3 + $0x2b] sm:$0xff]
    %v1386 = vld [vmem:[#allocation3 + $0x33] sm:$0xff]
    %v1387 = vld [vmem:[#allocation3 + $0x3b] sm:$0xff]
    %v1388 = vld [vmem:[#allocation3 + $0x43] sm:$0xff]
    %v1389 = vld [vmem:[#allocation3 + $0x4b] sm:$0xff]
    %v1390 = vld [vmem:[#allocation3 + $0x53] sm:$0xff]
    %v1391 = vld [vmem:[#allocation3 + $0x5b] sm:$0xff]
    %v1392 = vld [vmem:[#allocation3 + $0x63] sm:$0xff]
    %v1393 = vld [vmem:[#allocation3 + $0x6b] sm:$0xff]
    %v1394 = vld [vmem:[#allocation3 + $0x73] sm:$0xff]
    %v1395 = vld [vmem:[#allocation3 + $0x7b] sm:$0xff]
    %v1396 = vadd.f32 %v1092, 1.0
    %v1397 = vadd.f32 %v1093, 1.0
    %v1398 = vadd.f32 %v1094, 1.0
    %v1399 = vadd.f32 %v1095, 1.0
    %v1400 = vadd.f32 %v1096, 1.0
    %v1401 = vadd.f32 %v1097, 1.0
    %v1402 = vadd.f32 %v1098, 1.0
    %v1403 = vadd.f32 %v1099, 1.0
    %v1404 = vadd.f32 %v1100, 1.0
    %v1405 = vadd.f32 %v1101, 1.0
    %v1406 = vadd.f32 %v1102, 1.0
    %v1407 = vadd.f32 %v1103, 1.0
    %v1408 = vadd.f32 %v1104, 1.0
    %v1409 = vadd.f32 %v1105, 1.0
    %v1410 = vadd.f32 %v1106, 1.0
    %v1411 = vadd.f32 %v1107, 1.0
    %vm1412 = vcmp.ge.f32.partialorder %v1396, 0.0
    %vm1413 = vcmp.ge.f32.partialorder %v1397, 0.0
    %vm1414 = vcmp.ge.f32.partialorder %v1398, 0.0
    %vm1415 = vcmp.ge.f32.partialorder %v1399, 0.0
    %vm1416 = vcmp.ge.f32.partialorder %v1400, 0.0
    %vm1417 = vcmp.ge.f32.partialorder %v1401, 0.0
    %vm1418 = vcmp.ge.f32.partialorder %v1402, 0.0
    %vm1419 = vcmp.ge.f32.partialorder %v1403, 0.0
    %vm1420 = vcmp.ge.f32.partialorder %v1404, 0.0
    %vm1421 = vcmp.ge.f32.partialorder %v1405, 0.0
    %vm1422 = vcmp.ge.f32.partialorder %v1406, 0.0
    %vm1423 = vcmp.ge.f32.partialorder %v1407, 0.0
    %vm1424 = vcmp.ge.f32.partialorder %v1408, 0.0
    %vm1425 = vcmp.ge.f32.partialorder %v1409, 0.0
    %vm1426 = vcmp.ge.f32.partialorder %v1410, 0.0
    %vm1427 = vcmp.ge.f32.partialorder %v1411, 0.0
    %vm1428 = vcmp.lt.f32.partialorder %v1396, 16.0
    %vm1429 = vcmp.lt.f32.partialorder %v1397, 16.0
    %vm1430 = vcmp.lt.f32.partialorder %v1398, 16.0
    %vm1431 = vcmp.lt.f32.partialorder %v1399, 16.0
    %vm1432 = vcmp.lt.f32.partialorder %v1400, 16.0
    %vm1433 = vcmp.lt.f32.partialorder %v1401, 16.0
    %vm1434 = vcmp.lt.f32.partialorder %v1402, 16.0
    %vm1435 = vcmp.lt.f32.partialorder %v1403, 16.0
    %vm1436 = vcmp.lt.f32.partialorder %v1404, 16.0
    %vm1437 = vcmp.lt.f32.partialorder %v1405, 16.0
    %vm1438 = vcmp.lt.f32.partialorder %v1406, 16.0
    %vm1439 = vcmp.lt.f32.partialorder %v1407, 16.0
    %vm1440 = vcmp.lt.f32.partialorder %v1408, 16.0
    %vm1441 = vcmp.lt.f32.partialorder %v1409, 16.0
    %vm1442 = vcmp.lt.f32.partialorder %v1410, 16.0
    %vm1443 = vcmp.lt.f32.partialorder %v1411, 16.0
    %vm1444 = vmand %vm1412, %vm1428
    %vm1445 = vmand %vm1413, %vm1429
    %vm1446 = vmand %vm1414, %vm1430
    %vm1447 = vmand %vm1415, %vm1431
    %vm1448 = vmand %vm1416, %vm1432
    %vm1449 = vmand %vm1417, %vm1433
    %vm1450 = vmand %vm1418, %vm1434
    %vm1451 = vmand %vm1419, %vm1435
    %vm1452 = vmand %vm1420, %vm1436
    %vm1453 = vmand %vm1421, %vm1437
    %vm1454 = vmand %vm1422, %vm1438
    %vm1455 = vmand %vm1423, %vm1439
    %vm1456 = vmand %vm1424, %vm1440
    %vm1457 = vmand %vm1425, %vm1441
    %vm1458 = vmand %vm1426, %vm1442
    %vm1459 = vmand %vm1427, %vm1443
    %v1460 = vsel %vm1444, 1, 0
    %v1461 = vsel %vm1445, 1, 0
    %v1462 = vsel %vm1446, 1, 0
    %v1463 = vsel %vm1447, 1, 0
    %v1464 = vsel %vm1448, 1, 0
    %v1465 = vsel %vm1449, 1, 0
    %v1466 = vsel %vm1450, 1, 0
    %v1467 = vsel %vm1451, 1, 0
    %v1468 = vsel %vm1452, 1, 0
    %v1469 = vsel %vm1453, 1, 0
    %v1470 = vsel %vm1454, 1, 0
    %v1471 = vsel %vm1455, 1, 0
    %v1472 = vsel %vm1456, 1, 0
    %v1473 = vsel %vm1457, 1, 0
    %v1474 = vsel %vm1458, 1, 0
    %v1475 = vsel %vm1459, 1, 0
    %v1476 = vcvt.s32.f32 %v1460
    %v1477 = vcvt.s32.f32 %v1461
    %v1478 = vcvt.s32.f32 %v1462
    %v1479 = vcvt.s32.f32 %v1463
    %v1480 = vcvt.s32.f32 %v1464
    %v1481 = vcvt.s32.f32 %v1465
    %v1482 = vcvt.s32.f32 %v1466
    %v1483 = vcvt.s32.f32 %v1467
    %v1484 = vcvt.s32.f32 %v1468
    %v1485 = vcvt.s32.f32 %v1469
    %v1486 = vcvt.s32.f32 %v1470
    %v1487 = vcvt.s32.f32 %v1471
    %v1488 = vcvt.s32.f32 %v1472
    %v1489 = vcvt.s32.f32 %v1473
    %v1490 = vcvt.s32.f32 %v1474
    %v1491 = vcvt.s32.f32 %v1475
    %v1492 = vmul.f32 %v1380, %v1476
    %v1493 = vmul.f32 %v1381, %v1477
    %v1494 = vmul.f32 %v1382, %v1478
    %v1495 = vmul.f32 %v1383, %v1479
    %v1496 = vmul.f32 %v1384, %v1480
    %v1497 = vmul.f32 %v1385, %v1481
    %v1498 = vmul.f32 %v1386, %v1482
    %v1499 = vmul.f32 %v1387, %v1483
    %v1500 = vmul.f32 %v1388, %v1484
    %v1501 = vmul.f32 %v1389, %v1485
    %v1502 = vmul.f32 %v1390, %v1486
    %v1503 = vmul.f32 %v1391, %v1487
    %v1504 = vmul.f32 %v1392, %v1488
    %v1505 = vmul.f32 %v1393, %v1489
    %v1506 = vmul.f32 %v1394, %v1490
    %v1507 = vmul.f32 %v1395, %v1491
    %v1508 = vld [vmem:[#allocation3 + $0x4] sm:$0xff]
    %v1509 = vld [vmem:[#allocation3 + $0xc] sm:$0xff]
    %v1510 = vld [vmem:[#allocation3 + $0x14] sm:$0xff]
    %v1511 = vld [vmem:[#allocation3 + $0x1c] sm:$0xff]
    %v1512 = vld [vmem:[#allocation3 + $0x24] sm:$0xff]
    %v1513 = vld [vmem:[#allocation3 + $0x2c] sm:$0xff]
    %v1514 = vld [vmem:[#allocation3 + $0x34] sm:$0xff]
    %v1515 = vld [vmem:[#allocation3 + $0x3c] sm:$0xff]
    %v1516 = vld [vmem:[#allocation3 + $0x44] sm:$0xff]
    %v1517 = vld [vmem:[#allocation3 + $0x4c] sm:$0xff]
    %v1518 = vld [vmem:[#allocation3 + $0x54] sm:$0xff]
    %v1519 = vld [vmem:[#allocation3 + $0x5c] sm:$0xff]
    %v1520 = vld [vmem:[#allocation3 + $0x64] sm:$0xff]
    %v1521 = vld [vmem:[#allocation3 + $0x6c] sm:$0xff]
    %v1522 = vld [vmem:[#allocation3 + $0x74] sm:$0xff]
    %v1523 = vld [vmem:[#allocation3 + $0x7c] sm:$0xff]
    %v1524 = vadd.f32 %v1092, 2.0
    %v1525 = vadd.f32 %v1093, 2.0
    %v1526 = vadd.f32 %v1094, 2.0
    %v1527 = vadd.f32 %v1095, 2.0
    %v1528 = vadd.f32 %v1096, 2.0
    %v1529 = vadd.f32 %v1097, 2.0
    %v1530 = vadd.f32 %v1098, 2.0
    %v1531 = vadd.f32 %v1099, 2.0
    %v1532 = vadd.f32 %v1100, 2.0
    %v1533 = vadd.f32 %v1101, 2.0
    %v1534 = vadd.f32 %v1102, 2.0
    %v1535 = vadd.f32 %v1103, 2.0
    %v1536 = vadd.f32 %v1104, 2.0
    %v1537 = vadd.f32 %v1105, 2.0
    %v1538 = vadd.f32 %v1106, 2.0
    %v1539 = vadd.f32 %v1107, 2.0
    %vm1540 = vcmp.ge.f32.partialorder %v1524, 0.0
    %vm1541 = vcmp.ge.f32.partialorder %v1525, 0.0
    %vm1542 = vcmp.ge.f32.partialorder %v1526, 0.0
    %vm1543 = vcmp.ge.f32.partialorder %v1527, 0.0
    %vm1544 = vcmp.ge.f32.partialorder %v1528, 0.0
    %vm1545 = vcmp.ge.f32.partialorder %v1529, 0.0
    %vm1546 = vcmp.ge.f32.partialorder %v1530, 0.0
    %vm1547 = vcmp.ge.f32.partialorder %v1531, 0.0
    %vm1548 = vcmp.ge.f32.partialorder %v1532, 0.0
    %vm1549 = vcmp.ge.f32.partialorder %v1533, 0.0
    %vm1550 = vcmp.ge.f32.partialorder %v1534, 0.0
    %vm1551 = vcmp.ge.f32.partialorder %v1535, 0.0
    %vm1552 = vcmp.ge.f32.partialorder %v1536, 0.0
    %vm1553 = vcmp.ge.f32.partialorder %v1537, 0.0
    %vm1554 = vcmp.ge.f32.partialorder %v1538, 0.0
    %vm1555 = vcmp.ge.f32.partialorder %v1539, 0.0
    %vm1556 = vcmp.lt.f32.partialorder %v1524, 16.0
    %vm1557 = vcmp.lt.f32.partialorder %v1525, 16.0
    %vm1558 = vcmp.lt.f32.partialorder %v1526, 16.0
    %vm1559 = vcmp.lt.f32.partialorder %v1527, 16.0
    %vm1560 = vcmp.lt.f32.partialorder %v1528, 16.0
    %vm1561 = vcmp.lt.f32.partialorder %v1529, 16.0
    %vm1562 = vcmp.lt.f32.partialorder %v1530, 16.0
    %vm1563 = vcmp.lt.f32.partialorder %v1531, 16.0
    %vm1564 = vcmp.lt.f32.partialorder %v1532, 16.0
    %vm1565 = vcmp.lt.f32.partialorder %v1533, 16.0
    %vm1566 = vcmp.lt.f32.partialorder %v1534, 16.0
    %vm1567 = vcmp.lt.f32.partialorder %v1535, 16.0
    %vm1568 = vcmp.lt.f32.partialorder %v1536, 16.0
    %vm1569 = vcmp.lt.f32.partialorder %v1537, 16.0
    %vm1570 = vcmp.lt.f32.partialorder %v1538, 16.0
    %vm1571 = vcmp.lt.f32.partialorder %v1539, 16.0
    %vm1572 = vmand %vm1540, %vm1556
    %vm1573 = vmand %vm1541, %vm1557
    %vm1574 = vmand %vm1542, %vm1558
    %vm1575 = vmand %vm1543, %vm1559
    %vm1576 = vmand %vm1544, %vm1560
    %vm1577 = vmand %vm1545, %vm1561
    %vm1578 = vmand %vm1546, %vm1562
    %vm1579 = vmand %vm1547, %vm1563
    %vm1580 = vmand %vm1548, %vm1564
    %vm1581 = vmand %vm1549, %vm1565
    %vm1582 = vmand %vm1550, %vm1566
    %vm1583 = vmand %vm1551, %vm1567
    %vm1584 = vmand %vm1552, %vm1568
    %vm1585 = vmand %vm1553, %vm1569
    %vm1586 = vmand %vm1554, %vm1570
    %vm1587 = vmand %vm1555, %vm1571
    %v1588 = vsel %vm1572, 1, 0
    %v1589 = vsel %vm1573, 1, 0
    %v1590 = vsel %vm1574, 1, 0
    %v1591 = vsel %vm1575, 1, 0
    %v1592 = vsel %vm1576, 1, 0
    %v1593 = vsel %vm1577, 1, 0
    %v1594 = vsel %vm1578, 1, 0
    %v1595 = vsel %vm1579, 1, 0
    %v1596 = vsel %vm1580, 1, 0
    %v1597 = vsel %vm1581, 1, 0
    %v1598 = vsel %vm1582, 1, 0
    %v1599 = vsel %vm1583, 1, 0
    %v1600 = vsel %vm1584, 1, 0
    %v1601 = vsel %vm1585, 1, 0
    %v1602 = vsel %vm1586, 1, 0
    %v1603 = vsel %vm1587, 1, 0
    %v1604 = vcvt.s32.f32 %v1588
    %v1605 = vcvt.s32.f32 %v1589
    %v1606 = vcvt.s32.f32 %v1590
    %v1607 = vcvt.s32.f32 %v1591
    %v1608 = vcvt.s32.f32 %v1592
    %v1609 = vcvt.s32.f32 %v1593
    %v1610 = vcvt.s32.f32 %v1594
    %v1611 = vcvt.s32.f32 %v1595
    %v1612 = vcvt.s32.f32 %v1596
    %v1613 = vcvt.s32.f32 %v1597
    %v1614 = vcvt.s32.f32 %v1598
    %v1615 = vcvt.s32.f32 %v1599
    %v1616 = vcvt.s32.f32 %v1600
    %v1617 = vcvt.s32.f32 %v1601
    %v1618 = vcvt.s32.f32 %v1602
    %v1619 = vcvt.s32.f32 %v1603
    %v1620 = vmul.f32 %v1508, %v1604
    %v1621 = vmul.f32 %v1509, %v1605
    %v1622 = vmul.f32 %v1510, %v1606
    %v1623 = vmul.f32 %v1511, %v1607
    %v1624 = vmul.f32 %v1512, %v1608
    %v1625 = vmul.f32 %v1513, %v1609
    %v1626 = vmul.f32 %v1514, %v1610
    %v1627 = vmul.f32 %v1515, %v1611
    %v1628 = vmul.f32 %v1516, %v1612
    %v1629 = vmul.f32 %v1517, %v1613
    %v1630 = vmul.f32 %v1518, %v1614
    %v1631 = vmul.f32 %v1519, %v1615
    %v1632 = vmul.f32 %v1520, %v1616
    %v1633 = vmul.f32 %v1521, %v1617
    %v1634 = vmul.f32 %v1522, %v1618
    %v1635 = vmul.f32 %v1523, %v1619
    %1652 = vrot.lane.b32.xlu0 %v1348, 16
    %v1653 = vpop.permute.xlu0 %1652
    %1654 = vrot.lane.b32.xlu0 %v1349, 16
    %v1655 = vpop.permute.xlu0 %1654
    %1656 = vrot.lane.b32.xlu0 %v1350, 16
    %v1657 = vpop.permute.xlu0 %1656
    %1658 = vrot.lane.b32.xlu0 %v1351, 16
    %v1659 = vpop.permute.xlu0 %1658
    %1660 = vrot.lane.b32.xlu0 %v1352, 16
    %v1661 = vpop.permute.xlu0 %1660
    %1662 = vrot.lane.b32.xlu0 %v1353, 16
    %v1663 = vpop.permute.xlu0 %1662
    %1664 = vrot.lane.b32.xlu0 %v1354, 16
    %v1665 = vpop.permute.xlu0 %1664
    %1666 = vrot.lane.b32.xlu0 %v1355, 16
    %v1667 = vpop.permute.xlu0 %1666
    %1668 = vrot.lane.b32.xlu0 %v1356, 16
    %v1669 = vpop.permute.xlu0 %1668
    %1670 = vrot.lane.b32.xlu0 %v1357, 16
    %v1671 = vpop.permute.xlu0 %1670
    %1672 = vrot.lane.b32.xlu0 %v1358, 16
    %v1673 = vpop.permute.xlu0 %1672
    %1674 = vrot.lane.b32.xlu0 %v1359, 16
    %v1675 = vpop.permute.xlu0 %1674
    %1676 = vrot.lane.b32.xlu0 %v1360, 16
    %v1677 = vpop.permute.xlu0 %1676
    %1678 = vrot.lane.b32.xlu0 %v1361, 16
    %v1679 = vpop.permute.xlu0 %1678
    %1680 = vrot.lane.b32.xlu0 %v1362, 16
    %v1681 = vpop.permute.xlu0 %1680
    %1682 = vrot.lane.b32.xlu0 %v1363, 16
    %v1683 = vpop.permute.xlu0 %1682
    %1716 = vrot.lane.b32.xlu0 %v1364, 32
    %v1717 = vpop.permute.xlu0 %1716
    %1718 = vrot.lane.b32.xlu0 %v1365, 32
    %v1719 = vpop.permute.xlu0 %1718
    %1720 = vrot.lane.b32.xlu0 %v1366, 32
    %v1721 = vpop.permute.xlu0 %1720
    %1722 = vrot.lane.b32.xlu0 %v1367, 32
    %v1723 = vpop.permute.xlu0 %1722
    %1724 = vrot.lane.b32.xlu0 %v1368, 32
    %v1725 = vpop.permute.xlu0 %1724
    %1726 = vrot.lane.b32.xlu0 %v1369, 32
    %v1727 = vpop.permute.xlu0 %1726
    %1728 = vrot.lane.b32.xlu0 %v1370, 32
    %v1729 = vpop.permute.xlu0 %1728
    %1730 = vrot.lane.b32.xlu0 %v1371, 32
    %v1731 = vpop.permute.xlu0 %1730
    %1732 = vrot.lane.b32.xlu0 %v1372, 32
    %v1733 = vpop.permute.xlu0 %1732
    %1734 = vrot.lane.b32.xlu0 %v1373, 32
    %v1735 = vpop.permute.xlu0 %1734
    %1736 = vrot.lane.b32.xlu0 %v1374, 32
    %v1737 = vpop.permute.xlu0 %1736
    %1738 = vrot.lane.b32.xlu0 %v1375, 32
    %v1739 = vpop.permute.xlu0 %1738
    %1740 = vrot.lane.b32.xlu0 %v1376, 32
    %v1741 = vpop.permute.xlu0 %1740
    %1742 = vrot.lane.b32.xlu0 %v1377, 32
    %v1743 = vpop.permute.xlu0 %1742
    %1744 = vrot.lane.b32.xlu0 %v1378, 32
    %v1745 = vpop.permute.xlu0 %1744
    %1746 = vrot.lane.b32.xlu0 %v1379, 32
    %v1747 = vpop.permute.xlu0 %1746
    %1780 = vrot.lane.b32.xlu0 %v1492, 48
    %v1781 = vpop.permute.xlu0 %1780
    %1782 = vrot.lane.b32.xlu0 %v1493, 48
    %v1783 = vpop.permute.xlu0 %1782
    %1784 = vrot.lane.b32.xlu0 %v1494, 48
    %v1785 = vpop.permute.xlu0 %1784
    %1786 = vrot.lane.b32.xlu0 %v1495, 48
    %v1787 = vpop.permute.xlu0 %1786
    %1788 = vrot.lane.b32.xlu0 %v1496, 48
    %v1789 = vpop.permute.xlu0 %1788
    %1790 = vrot.lane.b32.xlu0 %v1497, 48
    %v1791 = vpop.permute.xlu0 %1790
    %1792 = vrot.lane.b32.xlu0 %v1498, 48
    %v1793 = vpop.permute.xlu0 %1792
    %1794 = vrot.lane.b32.xlu0 %v1499, 48
    %v1795 = vpop.permute.xlu0 %1794
    %1796 = vrot.lane.b32.xlu0 %v1500, 48
    %v1797 = vpop.permute.xlu0 %1796
    %1798 = vrot.lane.b32.xlu0 %v1501, 48
    %v1799 = vpop.permute.xlu0 %1798
    %1800 = vrot.lane.b32.xlu0 %v1502, 48
    %v1801 = vpop.permute.xlu0 %1800
    %1802 = vrot.lane.b32.xlu0 %v1503, 48
    %v1803 = vpop.permute.xlu0 %1802
    %1804 = vrot.lane.b32.xlu0 %v1504, 48
    %v1805 = vpop.permute.xlu0 %1804
    %1806 = vrot.lane.b32.xlu0 %v1505, 48
    %v1807 = vpop.permute.xlu0 %1806
    %1808 = vrot.lane.b32.xlu0 %v1506, 48
    %v1809 = vpop.permute.xlu0 %1808
    %1810 = vrot.lane.b32.xlu0 %v1507, 48
    %v1811 = vpop.permute.xlu0 %1810
    %1844 = vrot.lane.b32.xlu0 %v1620, 64
    %v1845 = vpop.permute.xlu0 %1844
    %1846 = vrot.lane.b32.xlu0 %v1621, 64
    %v1847 = vpop.permute.xlu0 %1846
    %1848 = vrot.lane.b32.xlu0 %v1622, 64
    %v1849 = vpop.permute.xlu0 %1848
    %1850 = vrot.lane.b32.xlu0 %v1623, 64
    %v1851 = vpop.permute.xlu0 %1850
    %1852 = vrot.lane.b32.xlu0 %v1624, 64
    %v1853 = vpop.permute.xlu0 %1852
    %1854 = vrot.lane.b32.xlu0 %v1625, 64
    %v1855 = vpop.permute.xlu0 %1854
    %1856 = vrot.lane.b32.xlu0 %v1626, 64
    %v1857 = vpop.permute.xlu0 %1856
    %1858 = vrot.lane.b32.xlu0 %v1627, 64
    %v1859 = vpop.permute.xlu0 %1858
    %1860 = vrot.lane.b32.xlu0 %v1628, 64
    %v1861 = vpop.permute.xlu0 %1860
    %1862 = vrot.lane.b32.xlu0 %v1629, 64
    %v1863 = vpop.permute.xlu0 %1862
    %1864 = vrot.lane.b32.xlu0 %v1630, 64
    %v1865 = vpop.permute.xlu0 %1864
    %1866 = vrot.lane.b32.xlu0 %v1631, 64
    %v1867 = vpop.permute.xlu0 %1866
    %1868 = vrot.lane.b32.xlu0 %v1632, 64
    %v1869 = vpop.permute.xlu0 %1868
    %1870 = vrot.lane.b32.xlu0 %v1633, 64
    %v1871 = vpop.permute.xlu0 %1870
    %1872 = vrot.lane.b32.xlu0 %v1634, 64
    %v1873 = vpop.permute.xlu0 %1872
    %1874 = vrot.lane.b32.xlu0 %v1635, 64
    %v1875 = vpop.permute.xlu0 %1874
    %v1892 = vsel %vm736, %v1220, %v1653
    %v1893 = vsel %vm736, %v1221, %v1655
    %v1894 = vsel %vm736, %v1222, %v1657
    %v1895 = vsel %vm736, %v1223, %v1659
    %v1896 = vsel %vm736, %v1224, %v1661
    %v1897 = vsel %vm736, %v1225, %v1663
    %v1898 = vsel %vm736, %v1226, %v1665
    %v1899 = vsel %vm736, %v1227, %v1667
    %v1900 = vsel %vm736, %v1228, %v1669
    %v1901 = vsel %vm736, %v1229, %v1671
    %v1902 = vsel %vm736, %v1230, %v1673
    %v1903 = vsel %vm736, %v1231, %v1675
    %v1904 = vsel %vm736, %v1232, %v1677
    %v1905 = vsel %vm736, %v1233, %v1679
    %v1906 = vsel %vm736, %v1234, %v1681
    %v1907 = vsel %vm736, %v1235, %v1683
    %vm1908 = vcmask 261120
    %v1909 = vsel %vm1908, %v1892, %v1717
    %v1910 = vsel %vm1908, %v1893, %v1719
    %v1911 = vsel %vm1908, %v1894, %v1721
    %v1912 = vsel %vm1908, %v1895, %v1723
    %v1913 = vsel %vm1908, %v1896, %v1725
    %v1914 = vsel %vm1908, %v1897, %v1727
    %v1915 = vsel %vm1908, %v1898, %v1729
    %v1916 = vsel %vm1908, %v1899, %v1731
    %v1917 = vsel %vm1908, %v1900, %v1733
    %v1918 = vsel %vm1908, %v1901, %v1735
    %v1919 = vsel %vm1908, %v1902, %v1737
    %v1920 = vsel %vm1908, %v1903, %v1739
    %v1921 = vsel %vm1908, %v1904, %v1741
    %v1922 = vsel %vm1908, %v1905, %v1743
    %v1923 = vsel %vm1908, %v1906, %v1745
    %v1924 = vsel %vm1908, %v1907, %v1747
    %vm1925 = vcmask 392192
    %v1926 = vsel %vm1925, %v1909, %v1781
    %v1927 = vsel %vm1925, %v1910, %v1783
    %v1928 = vsel %vm1925, %v1911, %v1785
    %v1929 = vsel %vm1925, %v1912, %v1787
    %v1930 = vsel %vm1925, %v1913, %v1789
    %v1931 = vsel %vm1925, %v1914, %v1791
    %v1932 = vsel %vm1925, %v1915, %v1793
    %v1933 = vsel %vm1925, %v1916, %v1795
    %v1934 = vsel %vm1925, %v1917, %v1797
    %v1935 = vsel %vm1925, %v1918, %v1799
    %v1936 = vsel %vm1925, %v1919, %v1801
    %v1937 = vsel %vm1925, %v1920, %v1803
    %v1938 = vsel %vm1925, %v1921, %v1805
    %v1939 = vsel %vm1925, %v1922, %v1807
    %v1940 = vsel %vm1925, %v1923, %v1809
    %v1941 = vsel %vm1925, %v1924, %v1811
    %vm1942 = vcmask 523264
    %v1943 = vsel %vm1942, %v1926, %v1845
    %v1944 = vsel %vm1942, %v1927, %v1847
    %v1945 = vsel %vm1942, %v1928, %v1849
    %v1946 = vsel %vm1942, %v1929, %v1851
    %v1947 = vsel %vm1942, %v1930, %v1853
    %v1948 = vsel %vm1942, %v1931, %v1855
    %v1949 = vsel %vm1942, %v1932, %v1857
    %v1950 = vsel %vm1942, %v1933, %v1859
    %v1951 = vsel %vm1942, %v1934, %v1861
    %v1952 = vsel %vm1942, %v1935, %v1863
    %v1953 = vsel %vm1942, %v1936, %v1865
    %v1954 = vsel %vm1942, %v1937, %v1867
    %v1955 = vsel %vm1942, %v1938, %v1869
    %v1956 = vsel %vm1942, %v1939, %v1871
    %v1957 = vsel %vm1942, %v1940, %v1873
    %v1958 = vsel %vm1942, %v1941, %v1875
    %v1959 = vld [vmem:[%s2] sm:$0xff]
    %v1960 = vld [vmem:[%s2 + $0x8] sm:$0xff]
    %v1961 = vld [vmem:[%s2 + $0x10] sm:$0xff]
    %v1962 = vld [vmem:[%s2 + $0x18] sm:$0xff]
    %v1963 = vld [vmem:[%s2 + $0x20] sm:$0xff]
    %v1964 = vld [vmem:[%s2 + $0x28] sm:$0xff]
    %v1965 = vld [vmem:[%s2 + $0x30] sm:$0xff]
    %v1966 = vld [vmem:[%s2 + $0x38] sm:$0xff]
    %v1967 = vld [vmem:[%s2 + $0x40] sm:$0xff]
    %v1968 = vld [vmem:[%s2 + $0x48] sm:$0xff]
    %v1969 = vld [vmem:[%s2 + $0x50] sm:$0x1]
    %v1970 = vlaneseq
    %v1971 = vshrl.u32 %v1970, 7
    %v1972 = vsub.s32 0, %v1971
    %v1973 = vrot.slane %v1969, %v1972
    %vm1974 = vcmask 654336
    %v1976 = vsel %vm1974, %v1943, 0
    %v1979 = vsel %vm1974, %v1944, 0
    %v1982 = vsel %vm1974, %v1945, 0
    %v1985 = vsel %vm1974, %v1946, 0
    %v1988 = vsel %vm1974, %v1947, 0
    %v1991 = vsel %vm1974, %v1948, 0
    %v1994 = vsel %vm1974, %v1949, 0
    %v1997 = vsel %vm1974, %v1950, 0
    %v2000 = vsel %vm1974, %v1951, 0
    %v2003 = vsel %vm1974, %v1952, 0
    %v2006 = vsel %vm1974, %v1953, 0
    %v2009 = vsel %vm1974, %v1954, 0
    %v2012 = vsel %vm1974, %v1955, 0
    %v2015 = vsel %vm1974, %v1956, 0
    %v2018 = vsel %vm1974, %v1957, 0
    %v2021 = vsel %vm1974, %v1958, 0
    %2023 = vmatprep.subr.mxu0 0.0
    %2024 = vmatpush1.msra.mxu0 0.0
    %2025 = vmatprep.subr.mxu0 0.0
    %2026 = vmatpush1.msra.mxu0 0.0
    %2027 = vmatprep.subr.mxu0 0.0
    %2028 = vmatpush1.msra.mxu0 0.0
    %2029 = vmatprep.subr.mxu0 0.0
    %2030 = vmatpush1.msra.mxu0 0.0
    %2031 = vmatprep.subr.mxu0 0.0
    %2032 = vmatpush1.msra.mxu0 0.0
    %2033 = vmatprep.subr.mxu0 0.0
    %2034 = vmatpush1.msra.mxu0 0.0
    %2035 = vmatprep.subr.mxu0 0.0
    %2036 = vmatpush1.msra.mxu0 %v1968
    %2037 = vmatprep.subr.mxu0 0.0
    %2038 = vmatpush1.msra.mxu0 %v1967
    %2039 = vmatprep.subr.mxu0 0.0
    %2040 = vmatpush1.msra.mxu0 %v1966
    %2041 = vmatprep.subr.mxu0 0.0
    %2042 = vmatpush1.msra.mxu0 %v1965
    %2043 = vmatprep.subr.mxu0 0.0
    %2044 = vmatpush1.msra.mxu0 %v1964
    %2045 = vmatprep.subr.mxu0 0.0
    %2046 = vmatpush1.msra.mxu0 %v1963
    %2047 = vmatprep.subr.mxu0 0.0
    %2048 = vmatpush1.msra.mxu0 %v1962
    %2049 = vmatprep.subr.mxu0 0.0
    %2050 = vmatpush1.msra.mxu0 %v1961
    %2051 = vmatprep.subr.mxu0 0.0
    %2052 = vmatpush1.msra.mxu0 %v1960
    %2053 = vmatprep.subr.mxu0 0.0
    %2054 = vmatpush1.msra.mxu0 %v1959
    %2055 = vmatprep.subr.mxu0 0.0
    %2056 = vmatpush2.msra.mxu0 0.0
    %2057 = vmatprep.subr.mxu0 0.0
    %2058 = vmatpush2.msra.mxu0 0.0
    %2059 = vmatprep.subr.mxu0 0.0
    %2060 = vmatpush2.msra.mxu0 0.0
    %2061 = vmatprep.subr.mxu0 0.0
    %2062 = vmatpush2.msra.mxu0 0.0
    %2063 = vmatprep.subr.mxu0 0.0
    %2064 = vmatpush2.msra.mxu0 0.0
    %2065 = vmatprep.subr.mxu0 0.0
    %2066 = vmatpush2.msra.mxu0 0.0
    %2067 = vmatprep.subr.mxu0 0.0
    %2068 = vmatpush2.msra.mxu0 0.0
    %2069 = vmatprep.subr.mxu0 0.0
    %2070 = vmatpush2.msra.mxu0 0.0
    %2071 = vmatprep.subr.mxu0 0.0
    %2072 = vmatpush2.msra.mxu0 0.0
    %2073 = vmatprep.subr.mxu0 0.0
    %2074 = vmatpush2.msra.mxu0 0.0
    %2075 = vmatprep.subr.mxu0 0.0
    %2076 = vmatpush2.msra.mxu0 0.0
    %2077 = vmatprep.subr.mxu0 0.0
    %2078 = vmatpush2.msra.mxu0 0.0
    %2079 = vmatprep.subr.mxu0 0.0
    %2080 = vmatpush2.msra.mxu0 0.0
    %2081 = vmatprep.subr.mxu0 0.0
    %2082 = vmatpush2.msra.mxu0 0.0
    %2083 = vmatprep.subr.mxu0 0.0
    %2084 = vmatpush2.msra.mxu0 0.0
    %2085 = vmatprep.subr.mxu0 0.0
    %2086 = vmatpush2.msra.mxu0 0.0
    %2087 = vmatprep.mubr.f32.mxu0 0.0
    %2088 = vmatmul.mubr.f32.gmra.mxu0 %v1976
    %v2089 = vpop.f32.mrf.mxu0
    %v2090 = vadd.f32 %v1973, %v2089
    %v2091 = vpop.f32.mrf.mxu0
    %2092 = vmatprep.mubr.f32.mxu0 0.0
    %2093 = vmatmul.mubr.f32.gmra.mxu0 %v1979
    %v2094 = vpop.f32.mrf.mxu0
    %v2095 = vadd.f32 %v1973, %v2094
    %v2096 = vpop.f32.mrf.mxu0
    %2097 = vmatprep.mubr.f32.mxu0 0.0
    %2098 = vmatmul.mubr.f32.gmra.mxu0 %v1982
    %v2099 = vpop.f32.mrf.mxu0
    %v2100 = vadd.f32 %v1973, %v2099
    %v2101 = vpop.f32.mrf.mxu0
    %2102 = vmatprep.mubr.f32.mxu0 0.0
    %2103 = vmatmul.mubr.f32.gmra.mxu0 %v1985
    %v2104 = vpop.f32.mrf.mxu0
    %v2105 = vadd.f32 %v1973, %v2104
    %v2106 = vpop.f32.mrf.mxu0
    %2107 = vmatprep.mubr.f32.mxu0 0.0
    %2108 = vmatmul.mubr.f32.gmra.mxu0 %v1988
    %v2109 = vpop.f32.mrf.mxu0
    %v2110 = vadd.f32 %v1973, %v2109
    %v2111 = vpop.f32.mrf.mxu0
    %2112 = vmatprep.mubr.f32.mxu0 0.0
    %2113 = vmatmul.mubr.f32.gmra.mxu0 %v1991
    %v2114 = vpop.f32.mrf.mxu0
    %v2115 = vadd.f32 %v1973, %v2114
    %v2116 = vpop.f32.mrf.mxu0
    %2117 = vmatprep.mubr.f32.mxu0 0.0
    %2118 = vmatmul.mubr.f32.gmra.mxu0 %v1994
    %v2119 = vpop.f32.mrf.mxu0
    %v2120 = vadd.f32 %v1973, %v2119
    %v2121 = vpop.f32.mrf.mxu0
    %2122 = vmatprep.mubr.f32.mxu0 0.0
    %2123 = vmatmul.mubr.f32.gmra.mxu0 %v1997
    %v2124 = vpop.f32.mrf.mxu0
    %v2125 = vadd.f32 %v1973, %v2124
    %v2126 = vpop.f32.mrf.mxu0
    %2127 = vmatprep.mubr.f32.mxu0 0.0
    %2128 = vmatmul.mubr.f32.gmra.mxu0 %v2000
    %v2129 = vpop.f32.mrf.mxu0
    %v2130 = vadd.f32 %v1973, %v2129
    %v2131 = vpop.f32.mrf.mxu0
    %2132 = vmatprep.mubr.f32.mxu0 0.0
    %2133 = vmatmul.mubr.f32.gmra.mxu0 %v2003
    %v2134 = vpop.f32.mrf.mxu0
    %v2135 = vadd.f32 %v1973, %v2134
    %v2136 = vpop.f32.mrf.mxu0
    %2137 = vmatprep.mubr.f32.mxu0 0.0
    %2138 = vmatmul.mubr.f32.gmra.mxu0 %v2006
    %v2139 = vpop.f32.mrf.mxu0
    %v2140 = vadd.f32 %v1973, %v2139
    %v2141 = vpop.f32.mrf.mxu0
    %2142 = vmatprep.mubr.f32.mxu0 0.0
    %2143 = vmatmul.mubr.f32.gmra.mxu0 %v2009
    %v2144 = vpop.f32.mrf.mxu0
    %v2145 = vadd.f32 %v1973, %v2144
    %v2146 = vpop.f32.mrf.mxu0
    %2147 = vmatprep.mubr.f32.mxu0 0.0
    %2148 = vmatmul.mubr.f32.gmra.mxu0 %v2012
    %v2149 = vpop.f32.mrf.mxu0
    %v2150 = vadd.f32 %v1973, %v2149
    %v2151 = vpop.f32.mrf.mxu0
    %2152 = vmatprep.mubr.f32.mxu0 0.0
    %2153 = vmatmul.mubr.f32.gmra.mxu0 %v2015
    %v2154 = vpop.f32.mrf.mxu0
    %v2155 = vadd.f32 %v1973, %v2154
    %v2156 = vpop.f32.mrf.mxu0
    %2157 = vmatprep.mubr.f32.mxu0 0.0
    %2158 = vmatmul.mubr.f32.gmra.mxu0 %v2018
    %v2159 = vpop.f32.mrf.mxu0
    %v2160 = vadd.f32 %v1973, %v2159
    %v2161 = vpop.f32.mrf.mxu0
    %2162 = vmatprep.mubr.f32.mxu0 0.0
    %2163 = vmatmul.mubr.f32.gmra.mxu0 %v2021
    %v2164 = vpop.f32.mrf.mxu0
    %v2165 = vadd.f32 %v1973, %v2164
    %v2166 = vpop.f32.mrf.mxu0
    %2167 = vdwg.mxu0
    %v2168 = vmax.f32 %v2090, 0.0
    %v2169 = vmax.f32 %v2095, 0.0
    %v2170 = vmax.f32 %v2100, 0.0
    %v2171 = vmax.f32 %v2105, 0.0
    %v2172 = vmax.f32 %v2110, 0.0
    %v2173 = vmax.f32 %v2115, 0.0
    %v2174 = vmax.f32 %v2120, 0.0
    %v2175 = vmax.f32 %v2125, 0.0
    %v2176 = vmax.f32 %v2130, 0.0
    %v2177 = vmax.f32 %v2135, 0.0
    %v2178 = vmax.f32 %v2140, 0.0
    %v2179 = vmax.f32 %v2145, 0.0
    %v2180 = vmax.f32 %v2150, 0.0
    %v2181 = vmax.f32 %v2155, 0.0
    %v2182 = vmax.f32 %v2160, 0.0
    %v2183 = vmax.f32 %v2165, 0.0
    %2184 = vst.msk [vmem:[#allocation4] sm:$0xff] %vm736, %v2168
    %2185 = vst.msk [vmem:[#allocation4 + $0x8] sm:$0xff] %vm736, %v2169
    %2186 = vst.msk [vmem:[#allocation4 + $0x10] sm:$0xff] %vm736, %v2170
    %2187 = vst.msk [vmem:[#allocation4 + $0x18] sm:$0xff] %vm736, %v2171
    %2188 = vst.msk [vmem:[#allocation4 + $0x20] sm:$0xff] %vm736, %v2172
    %2189 = vst.msk [vmem:[#allocation4 + $0x28] sm:$0xff] %vm736, %v2173
    %2190 = vst.msk [vmem:[#allocation4 + $0x30] sm:$0xff] %vm736, %v2174
    %2191 = vst.msk [vmem:[#allocation4 + $0x38] sm:$0xff] %vm736, %v2175
    %2192 = vst.msk [vmem:[#allocation4 + $0x40] sm:$0xff] %vm736, %v2176
    %2193 = vst.msk [vmem:[#allocation4 + $0x48] sm:$0xff] %vm736, %v2177
    %2194 = vst.msk [vmem:[#allocation4 + $0x50] sm:$0xff] %vm736, %v2178
    %2195 = vst.msk [vmem:[#allocation4 + $0x58] sm:$0xff] %vm736, %v2179
    %2196 = vst.msk [vmem:[#allocation4 + $0x60] sm:$0xff] %vm736, %v2180
    %2197 = vst.msk [vmem:[#allocation4 + $0x68] sm:$0xff] %vm736, %v2181
    %2198 = vst.msk [vmem:[#allocation4 + $0x70] sm:$0xff] %vm736, %v2182
    %2199 = vst.msk [vmem:[#allocation4 + $0x78] sm:$0xff] %vm736, %v2183
    %v2200 = vld [vmem:[#allocation4] ss:$16 sm:$0x3]
    %v2201 = vld [vmem:[#allocation4] ss:$16 sm:$0xc]
    %v2202 = vor.u32 %v2200, %v2201
    %v2203 = vld [vmem:[#allocation4] ss:$16 sm:$0x30]
    %v2204 = vor.u32 %v2202, %v2203
    %v2205 = vld [vmem:[#allocation4] ss:$16 sm:$0xc0]
    %v2206 = vor.u32 %v2204, %v2205
    %s2207 = scalar_lea.vmem [#allocation4], 1
    %v2208 = vld [vmem:[%s2207] ss:$16 sm:$0x3]
    %v2209 = vld [vmem:[%s2207] ss:$16 sm:$0xc]
    %v2210 = vor.u32 %v2208, %v2209
    %v2211 = vld [vmem:[%s2207] ss:$16 sm:$0x30]
    %v2212 = vor.u32 %v2210, %v2211
    %v2213 = vld [vmem:[%s2207] ss:$16 sm:$0xc0]
    %v2214 = vor.u32 %v2212, %v2213
    %v2215 = vmax.f32 %v2206, %v2214
    %s2216 = scalar_lea.vmem [#allocation4], 2
    %v2217 = vld [vmem:[%s2216] ss:$16 sm:$0x3]
    %v2218 = vld [vmem:[%s2216] ss:$16 sm:$0xc]
    %v2219 = vor.u32 %v2217, %v2218
    %v2220 = vld [vmem:[%s2216] ss:$16 sm:$0x30]
    %v2221 = vor.u32 %v2219, %v2220
    %v2222 = vld [vmem:[%s2216] ss:$16 sm:$0xc0]
    %v2223 = vor.u32 %v2221, %v2222
    %v2224 = vmax.f32 %v2215, %v2223
    %s2225 = scalar_lea.vmem [#allocation4], 3
    %v2226 = vld [vmem:[%s2225] ss:$16 sm:$0x3]
    %v2227 = vld [vmem:[%s2225] ss:$16 sm:$0xc]
    %v2228 = vor.u32 %v2226, %v2227
    %v2229 = vld [vmem:[%s2225] ss:$16 sm:$0x30]
    %v2230 = vor.u32 %v2228, %v2229
    %v2231 = vld [vmem:[%s2225] ss:$16 sm:$0xc0]
    %v2232 = vor.u32 %v2230, %v2231
    %v2233 = vmax.f32 %v2224, %v2232
    %s2234 = scalar_lea.vmem [#allocation4], 4
    %v2235 = vld [vmem:[%s2234] ss:$16 sm:$0x3]
    %v2236 = vld [vmem:[%s2234] ss:$16 sm:$0xc]
    %v2237 = vor.u32 %v2235, %v2236
    %v2238 = vld [vmem:[%s2234] ss:$16 sm:$0x30]
    %v2239 = vor.u32 %v2237, %v2238
    %v2240 = vld [vmem:[%s2234] ss:$16 sm:$0xc0]
    %v2241 = vor.u32 %v2239, %v2240
    %s2242 = scalar_lea.vmem [#allocation4], 5
    %v2243 = vld [vmem:[%s2242] ss:$16 sm:$0x3]
    %v2244 = vld [vmem:[%s2242] ss:$16 sm:$0xc]
    %v2245 = vor.u32 %v2243, %v2244
    %v2246 = vld [vmem:[%s2242] ss:$16 sm:$0x30]
    %v2247 = vor.u32 %v2245, %v2246
    %v2248 = vld [vmem:[%s2242] ss:$16 sm:$0xc0]
    %v2249 = vor.u32 %v2247, %v2248
    %v2250 = vmax.f32 %v2241, %v2249
    %s2251 = scalar_lea.vmem [#allocation4], 6
    %v2252 = vld [vmem:[%s2251] ss:$16 sm:$0x3]
    %v2253 = vld [vmem:[%s2251] ss:$16 sm:$0xc]
    %v2254 = vor.u32 %v2252, %v2253
    %v2255 = vld [vmem:[%s2251] ss:$16 sm:$0x30]
    %v2256 = vor.u32 %v2254, %v2255
    %v2257 = vld [vmem:[%s2251] ss:$16 sm:$0xc0]
    %v2258 = vor.u32 %v2256, %v2257
    %v2259 = vmax.f32 %v2250, %v2258
    %s2260 = scalar_lea.vmem [#allocation4], 7
    %v2261 = vld [vmem:[%s2260] ss:$16 sm:$0x3]
    %v2262 = vld [vmem:[%s2260] ss:$16 sm:$0xc]
    %v2263 = vor.u32 %v2261, %v2262
    %v2264 = vld [vmem:[%s2260] ss:$16 sm:$0x30]
    %v2265 = vor.u32 %v2263, %v2264
    %v2266 = vld [vmem:[%s2260] ss:$16 sm:$0xc0]
    %v2267 = vor.u32 %v2265, %v2266
    %v2268 = vmax.f32 %v2259, %v2267
    %s2269 = scalar_lea.vmem [#allocation4], 8
    %v2270 = vld [vmem:[%s2269] ss:$16 sm:$0x3]
    %v2271 = vld [vmem:[%s2269] ss:$16 sm:$0xc]
    %v2272 = vor.u32 %v2270, %v2271
    %v2273 = vld [vmem:[%s2269] ss:$16 sm:$0x30]
    %v2274 = vor.u32 %v2272, %v2273
    %v2275 = vld [vmem:[%s2269] ss:$16 sm:$0xc0]
    %v2276 = vor.u32 %v2274, %v2275
    %s2277 = scalar_lea.vmem [#allocation4], 9
    %v2278 = vld [vmem:[%s2277] ss:$16 sm:$0x3]
    %v2279 = vld [vmem:[%s2277] ss:$16 sm:$0xc]
    %v2280 = vor.u32 %v2278, %v2279
    %v2281 = vld [vmem:[%s2277] ss:$16 sm:$0x30]
    %v2282 = vor.u32 %v2280, %v2281
    %v2283 = vld [vmem:[%s2277] ss:$16 sm:$0xc0]
    %v2284 = vor.u32 %v2282, %v2283
    %v2285 = vmax.f32 %v2276, %v2284
    %s2286 = scalar_lea.vmem [#allocation4], 10
    %v2287 = vld [vmem:[%s2286] ss:$16 sm:$0x3]
    %v2288 = vld [vmem:[%s2286] ss:$16 sm:$0xc]
    %v2289 = vor.u32 %v2287, %v2288
    %v2290 = vld [vmem:[%s2286] ss:$16 sm:$0x30]
    %v2291 = vor.u32 %v2289, %v2290
    %v2292 = vld [vmem:[%s2286] ss:$16 sm:$0xc0]
    %v2293 = vor.u32 %v2291, %v2292
    %v2294 = vmax.f32 %v2285, %v2293
    %s2295 = scalar_lea.vmem [#allocation4], 11
    %v2296 = vld [vmem:[%s2295] ss:$16 sm:$0x3]
    %v2297 = vld [vmem:[%s2295] ss:$16 sm:$0xc]
    %v2298 = vor.u32 %v2296, %v2297
    %v2299 = vld [vmem:[%s2295] ss:$16 sm:$0x30]
    %v2300 = vor.u32 %v2298, %v2299
    %v2301 = vld [vmem:[%s2295] ss:$16 sm:$0xc0]
    %v2302 = vor.u32 %v2300, %v2301
    %v2303 = vmax.f32 %v2294, %v2302
    %s2304 = scalar_lea.vmem [#allocation4], 12
    %v2305 = vld [vmem:[%s2304] ss:$16 sm:$0x3]
    %v2306 = vld [vmem:[%s2304] ss:$16 sm:$0xc]
    %v2307 = vor.u32 %v2305, %v2306
    %v2308 = vld [vmem:[%s2304] ss:$16 sm:$0x30]
    %v2309 = vor.u32 %v2307, %v2308
    %v2310 = vld [vmem:[%s2304] ss:$16 sm:$0xc0]
    %v2311 = vor.u32 %v2309, %v2310
    %s2312 = scalar_lea.vmem [#allocation4], 13
    %v2313 = vld [vmem:[%s2312] ss:$16 sm:$0x3]
    %v2314 = vld [vmem:[%s2312] ss:$16 sm:$0xc]
    %v2315 = vor.u32 %v2313, %v2314
    %v2316 = vld [vmem:[%s2312] ss:$16 sm:$0x30]
    %v2317 = vor.u32 %v2315, %v2316
    %v2318 = vld [vmem:[%s2312] ss:$16 sm:$0xc0]
    %v2319 = vor.u32 %v2317, %v2318
    %v2320 = vmax.f32 %v2311, %v2319
    %s2321 = scalar_lea.vmem [#allocation4], 14
    %v2322 = vld [vmem:[%s2321] ss:$16 sm:$0x3]
    %v2323 = vld [vmem:[%s2321] ss:$16 sm:$0xc]
    %v2324 = vor.u32 %v2322, %v2323
    %v2325 = vld [vmem:[%s2321] ss:$16 sm:$0x30]
    %v2326 = vor.u32 %v2324, %v2325
    %v2327 = vld [vmem:[%s2321] ss:$16 sm:$0xc0]
    %v2328 = vor.u32 %v2326, %v2327
    %v2329 = vmax.f32 %v2320, %v2328
    %s2330 = scalar_lea.vmem [#allocation4], 15
    %v2331 = vld [vmem:[%s2330] ss:$16 sm:$0x3]
    %v2332 = vld [vmem:[%s2330] ss:$16 sm:$0xc]
    %v2333 = vor.u32 %v2331, %v2332
    %v2334 = vld [vmem:[%s2330] ss:$16 sm:$0x30]
    %v2335 = vor.u32 %v2333, %v2334
    %v2336 = vld [vmem:[%s2330] ss:$16 sm:$0xc0]
    %v2337 = vor.u32 %v2335, %v2336
    %v2338 = vmax.f32 %v2329, %v2337
    %2340 = vrot.lane.b32.xlu0 %v2268, 16
    %v2341 = vpop.permute.xlu0 %2340
    %2344 = vrot.lane.b32.xlu0 %v2303, 32
    %v2345 = vpop.permute.xlu0 %2344
    %2348 = vrot.lane.b32.xlu0 %v2338, 48
    %v2349 = vpop.permute.xlu0 %2348
    %v2351 = vsel %vm736, %v2233, %v2341
    %v2352 = vsel %vm1908, %v2351, %v2345
    %v2353 = vsel %vm1925, %v2352, %v2349
    %v2354 = vld [vmem:[%s3] sm:$0x1]
    %v2356 = vsel %vm1942, %v2354, 0
    %v2359 = vsel %vm1942, %v2353, 0
    %2361 = vmatprep.subr.mxu0 0.0
    %2362 = vmatpush1.xpose.msra.mxu0 0.0
    %2363 = vmatprep.subr.mxu0 0.0
    %2364 = vmatpush1.xpose.msra.mxu0 0.0
    %2365 = vmatprep.subr.mxu0 0.0
    %2366 = vmatpush1.xpose.msra.mxu0 0.0
    %2367 = vmatprep.subr.mxu0 0.0
    %2368 = vmatpush1.xpose.msra.mxu0 0.0
    %2369 = vmatprep.subr.mxu0 0.0
    %2370 = vmatpush1.xpose.msra.mxu0 0.0
    %2371 = vmatprep.subr.mxu0 0.0
    %2372 = vmatpush1.xpose.msra.mxu0 0.0
    %2373 = vmatprep.subr.mxu0 0.0
    %2374 = vmatpush1.xpose.msra.mxu0 0.0
    %2375 = vmatprep.subr.mxu0 0.0
    %2376 = vmatpush1.xpose.msra.mxu0 0.0
    %2377 = vmatprep.subr.mxu0 0.0
    %2378 = vmatpush1.xpose.msra.mxu0 0.0
    %2379 = vmatprep.subr.mxu0 0.0
    %2380 = vmatpush1.xpose.msra.mxu0 0.0
    %2381 = vmatprep.subr.mxu0 0.0
    %2382 = vmatpush1.xpose.msra.mxu0 0.0
    %2383 = vmatprep.subr.mxu0 0.0
    %2384 = vmatpush1.xpose.msra.mxu0 0.0
    %2385 = vmatprep.subr.mxu0 0.0
    %2386 = vmatpush1.xpose.msra.mxu0 0.0
    %2387 = vmatprep.subr.mxu0 0.0
    %2388 = vmatpush1.xpose.msra.mxu0 0.0
    %2389 = vmatprep.subr.mxu0 0.0
    %2390 = vmatpush1.xpose.msra.mxu0 0.0
    %2391 = vmatprep.subr.mxu0 0.0
    %2392 = vmatpush1.xpose.msra.mxu0 %v2359
    %2393 = vmatprep.subr.mxu0 0.0
    %2394 = vmatpush2.xpose.msra.mxu0 0.0
    %2395 = vmatprep.subr.mxu0 0.0
    %2396 = vmatpush2.xpose.msra.mxu0 0.0
    %2397 = vmatprep.subr.mxu0 0.0
    %2398 = vmatpush2.xpose.msra.mxu0 0.0
    %2399 = vmatprep.subr.mxu0 0.0
    %2400 = vmatpush2.xpose.msra.mxu0 0.0
    %2401 = vmatprep.subr.mxu0 0.0
    %2402 = vmatpush2.xpose.msra.mxu0 0.0
    %2403 = vmatprep.subr.mxu0 0.0
    %2404 = vmatpush2.xpose.msra.mxu0 0.0
    %2405 = vmatprep.subr.mxu0 0.0
    %2406 = vmatpush2.xpose.msra.mxu0 0.0
    %2407 = vmatprep.subr.mxu0 0.0
    %2408 = vmatpush2.xpose.msra.mxu0 0.0
    %2409 = vmatprep.subr.mxu0 0.0
    %2410 = vmatpush2.xpose.msra.mxu0 0.0
    %2411 = vmatprep.subr.mxu0 0.0
    %2412 = vmatpush2.xpose.msra.mxu0 0.0
    %2413 = vmatprep.subr.mxu0 0.0
    %2414 = vmatpush2.xpose.msra.mxu0 0.0
    %2415 = vmatprep.subr.mxu0 0.0
    %2416 = vmatpush2.xpose.msra.mxu0 0.0
    %2417 = vmatprep.subr.mxu0 0.0
    %2418 = vmatpush2.xpose.msra.mxu0 0.0
    %2419 = vmatprep.subr.mxu0 0.0
    %2420 = vmatpush2.xpose.msra.mxu0 0.0
    %2421 = vmatprep.subr.mxu0 0.0
    %2422 = vmatpush2.xpose.msra.mxu0 0.0
    %2423 = vmatprep.subr.mxu0 0.0
    %2424 = vmatpush2.xpose.msra.mxu0 0.0
    %2425 = vmatprep.mubr.f32.mxu0 0.0
    %2426 = vmatmul.mubr.f32.gmra.mxu0 %v2356
    %v2427 = vpop.f32.mrf.mxu0
    %v2428 = vadd.f32 0.0, %v2427
    %v2429 = vpop.f32.mrf.mxu0
    %2430 = vdwg.mxu0
    %vm2431 = vcmask 57344
    %2432 = vst.msk [vmem:[#allocation5] sm:$0x1] %vm2431, %v2428
    // Predicated region
    $region18: #{tpu_custom_call.1} parent=1 // pred_check
      _
    $region19: #{tpu_custom_call.1} parent=1 // pred_check_branch
      %2434 = sbr.rel (0) target = $region21
    $region20: #{tpu_custom_call.1} parent=1 // pred_region
      %s2436 = ssub.s32 16, 16
      %2437 = vsyncadd [#allocation6], %s2436
      %s2439 = sshll.u32 [#allocation5], 4
      %s2440 = int_to_ptr.vmem [resolvable:$true] %s2439
      %2442 = dma.vmem_to_hbm [thread:$0]  %s2440, 16, %s4, [#allocation6]
    $region21: #{tpu_custom_call.1} parent=1 // pred_fallthru
      _
    // Predicated region
    $region22: #{tpu_custom_call.1} parent=1 // pred_check
      _
    $region23: #{tpu_custom_call.1} parent=1 // pred_check_branch
      %2444 = sbr.rel (0) target = $region25
    $region24: #{tpu_custom_call.1} parent=1 // pred_region
      %2445 = dma.done [#allocation6], 16
    $region25: #{tpu_custom_call.1} parent=1 // pred_fallthru
      _
    %2446 = vsyncpa [#allocation6], 1

</llo_original>
